<compile_context>
chip_gen: v7x
topology: tpu7x:2x2x1
jax: 0.10.0
libtpu: 0.0.40
codegen_flags: <defaults>
</compile_context>

<pallas_src>
import functools

import jax
import jax.numpy as jnp
from jax import lax
from jax.experimental import pallas as pl
from jax.experimental.pallas import tpu as pltpu

# --- model hyper-parameters (EncoderLayer / OutputLayer constants) -----------
V_DECAY = 0.9     # encoder LIF voltage decay
V_THRESH = 1.0    # encoder LIF firing threshold
M_DECAY = 0.9     # output-layer membrane decay (leaky integrator, no spike)

_UNROLL_LIMIT = 32       # Python-unroll the serial loops up to this many steps
_FORI_UNROLL = 8         # partial unroll for lax.fori_loop above the limit
_VMEM_BUDGET = 8 << 20   # per-grid-step slab budget (safe on v5e/v6e/v7x)


def _row_start(t, tile):
    """Sublane start row t*tile, with an alignment hint when t is traced."""
    if isinstance(t, int):
        return t * tile
    return pl.multiple_of(t * tile, tile)


def _lsnn_nhdn_kernel(x_ref, w_pos_ref, w_neg_ref, out_ref,
                      v_pos_ref, v_neg_ref, m_ref,
                      spk_pos_ref, spk_neg_ref, prod_ref,
                      *, time_block, use_bf16):
    """One grid step == one (batch-tile, time-block) slab of the recurrence.

    x_ref        : (TB, tb, ORDER)        input slab
    w_pos/w_neg  : (ORDER, C)             readout weights (resident)
    out_ref      : (TB, tb, C)            membrane-potential trace slab
    v_pos/v_neg  : VMEM (TB, ORDER)       encoder LIF voltages (persistent)
    m_ref        : VMEM (TB, C)           output membrane      (persistent)
    spk_pos/neg  : VMEM (tb*TB, ORDER)    per-block spike buffers
    prod_ref     : VMEM (tb*TB, C)        batched readout for the block
    """
    tb = time_block
    TB, order = v_pos_ref.shape
    C = m_ref.shape[1]
    t_blk = pl.program_id(1)

    # reset_v() / reset_states(): zero recurrent state at the start of each
    # batch tile's time sweep.
    @pl.when(t_blk == 0)
    def _():
        v_pos_ref[...] = jnp.zeros_like(v_pos_ref)
        v_neg_ref[...] = jnp.zeros_like(v_neg_ref)
        m_ref[...] = jnp.zeros_like(m_ref)

    # ---- Phase 1: truly serial encoder-LIF recurrence (f32 on the VPU).
    # Spikes are written straight into sublane-aligned VMEM scratch; no
    # Python-list accumulation, no concatenate.
    def step_encode(t, carry):
        v_pos, v_neg = carry
        x_t = x_ref[:, t, :].astype(jnp.float32)            # (TB, ORDER)
        v_pos = v_pos * V_DECAY + jnp.maximum(x_t, 0.0)     # on-channel
        v_neg = v_neg * V_DECAY + jnp.maximum(-x_t, 0.0)    # off-channel
        s_pos = (v_pos >= V_THRESH).astype(jnp.float32)
        s_neg = (v_neg >= V_THRESH).astype(jnp.float32)
        v_pos = v_pos - s_pos * V_THRESH                    # soft reset
        v_neg = v_neg - s_neg * V_THRESH
        row = _row_start(t, TB)
        spk_pos_ref[pl.ds(row, TB), :] = s_pos
        spk_neg_ref[pl.ds(row, TB), :] = s_neg
        return v_pos, v_neg

    carry = (v_pos_ref[...], v_neg_ref[...])
    if tb <= _UNROLL_LIMIT:
        for t in range(tb):                                  # static unroll
            carry = step_encode(t, carry)
    else:
        carry = lax.fori_loop(0, tb, step_encode, carry, unroll=_FORI_UNROLL)
    v_pos, v_neg = carry
    v_pos_ref[...] = v_pos
    v_neg_ref[...] = v_neg

    # ---- Phase 2: ONE batched readout matmul for the whole time block
    # (M = tb*TB rows).  Split pos/neg halves avoid any lane-axis concat.
    spk_pos = spk_pos_ref[...]
    spk_neg = spk_neg_ref[...]
    w_pos = w_pos_ref[...]
    w_neg = w_neg_ref[...]
    if use_bf16:
        # Spikes are exact 0/1 in bf16; only w rounds; accumulation stays f32.
        spk_pos = spk_pos.astype(jnp.bfloat16)
        spk_neg = spk_neg.astype(jnp.bfloat16)
        w_pos = w_pos.astype(jnp.bfloat16)
        w_neg = w_neg.astype(jnp.bfloat16)
    prod_ref[...] = (
        jnp.dot(spk_pos, w_pos, preferred_element_type=jnp.float32)
        + jnp.dot(spk_neg, w_neg, preferred_element_type=jnp.float32))

    # ---- Phase 3: cheap serial leaky integration with direct per-step stores
    # into out_ref (no stack / layout copies, flat vreg pressure).
    def step_out(t, m):
        row = _row_start(t, TB)
        m = m * M_DECAY + prod_ref[pl.ds(row, TB), :]
        out_ref[:, t, :] = m.astype(out_ref.dtype)
        return m

    m = m_ref[...]
    if tb <= _UNROLL_LIMIT:
        for t in range(tb):
            m = step_out(t, m)
    else:
        m = lax.fori_loop(0, tb, step_out, m, unroll=_FORI_UNROLL)
    m_ref[...] = m


def _pick_batch_tile(b_padded, max_tile=256):
    """Multiple-of-8 divisor of the padded batch; prefer >=2 tiles (v7x)."""
    if b_padded <= 8:
        return b_padded
    divisors = [d for d in range(8, min(b_padded, max_tile) + 1, 8)
                if b_padded % d == 0]
    multi = [d for d in divisors if b_padded // d >= 2]
    if multi:
        return max(multi)
    return divisors[-1] if divisors else b_padded


def _pick_time_block(T, TB, order, C, budget_bytes):
    """Largest multiple-of-8 time block whose slab fits the VMEM budget."""
    # Per-time-step VMEM bytes for one grid step:
    #   x slab   TB*order*4   (double buffered -> x2)
    #   out slab TB*C*4       (double buffered -> x2)
    #   scratch  spk_pos + spk_neg + prod: TB*(2*order + C)*4
    per_t = 4 * TB * (2 * (order + C) + 2 * order + C)
    max_tb = max(8, budget_bytes // max(per_t, 1))
    if T <= max_tb:
        return T                      # whole time axis in one grid step
    best = None
    cand = 8
    limit = min(T - 1, max_tb)
    while cand <= limit:
        if T % cand == 0:
            best = cand
        cand += 8
    return best if best is not None else T


def lsnn_nhdn_forward(x_btn, w, *, time_block=None, batch_tile=None,
                      vmem_limit_bytes=None):
    """x_btn: (B, T, ORDER) float32; w: (2*ORDER, C) float32 -> (B, T, C) f32."""
    B, T, order = x_btn.shape
    two_order, C = w.shape
    assert two_order == 2 * order, "readout weight must be (2*ORDER, C)"

    # Pad the batch to a multiple of 8: keeps every (TB, .) tile and scratch
    # store sublane-aligned.  Padded rows see zero input -> zero spikes ->
    # zero output; they are sliced away below.
    b_pad = -(-B // 8) * 8
    if b_pad != B:
        x_btn = jnp.pad(x_btn, ((0, b_pad - B), (0, 0), (0, 0)))

    TB = batch_tile if batch_tile is not None else _pick_batch_tile(b_pad)
    assert TB % 8 == 0, "batch tile must be a multiple of 8 (sublane aligned)"
    assert b_pad % TB == 0, "batch tile must divide the (padded) batch"

    tb = time_block if time_block is not None else _pick_time_block(
        T, TB, order, C, _VMEM_BUDGET)
    if tb != T:
        assert T % tb == 0 and tb % 8 == 0, "time block must tile the time axis"

    nb = b_pad // TB
    nt = T // tb

    # bf16 on the MXU only when the contraction is big enough to matter; the
    # toy (K=16, N=10) readout stays in f32 (well below one MXU tile anyway).
    use_bf16 = two_order >= 128

    kernel = functools.partial(_lsnn_nhdn_kernel, time_block=tb,
                               use_bf16=use_bf16)

    cp_kwargs = dict(
        # batch tiles are independent (megacore-shardable on v7x); the time
        # axis carries the recurrence and MUST stay "arbitrary".
        dimension_semantics=("parallel", "arbitrary"),
    )
    if vmem_limit_bytes is not None:
        cp_kwargs["vmem_limit_bytes"] = vmem_limit_bytes

    out = pl.pallas_call(
        kernel,
        out_shape=jax.ShapeDtypeStruct((b_pad, T, C), jnp.float32),
        grid_spec=pltpu.PrefetchScalarGridSpec(
            num_scalar_prefetch=0,
            grid=(nb, nt),
            in_specs=[
                pl.BlockSpec((TB, tb, order), lambda b, t: (b, t, 0)),
                pl.BlockSpec((order, C), lambda b, t: (0, 0)),   # w_pos resident
                pl.BlockSpec((order, C), lambda b, t: (0, 0)),   # w_neg resident
            ],
            # TODO(synk): for production class counts keep C a multiple of 128
            # (lane-dense, unmasked vst); C=10 is left unpadded here.
            out_specs=pl.BlockSpec((TB, tb, C), lambda b, t: (b, t, 0)),
            scratch_shapes=[
                pltpu.VMEM((TB, order), jnp.float32),        # encoder v (on)
                pltpu.VMEM((TB, order), jnp.float32),        # encoder v (off)
                pltpu.VMEM((TB, C), jnp.float32),            # output membrane
                pltpu.VMEM((tb * TB, order), jnp.float32),   # spikes (on)
                pltpu.VMEM((tb * TB, order), jnp.float32),   # spikes (off)
                pltpu.VMEM((tb * TB, C), jnp.float32),       # batched readout
            ],
        ),
        compiler_params=pltpu.CompilerParams(**cp_kwargs),
    )(x_btn, w[:order, :], w[order:, :])

    return out[:B] if b_pad != B else out


def reference_forward(x_btn, w):
    """Plain-JAX reference of the same recurrence (sanity check)."""
    B, T, order = x_btn.shape
    C = w.shape[1]
    v = jnp.zeros((B, 2 * order), jnp.float32)
    m = jnp.zeros((B, C), jnp.float32)
    outs = []
    for t in range(T):
        x_t = x_btn[:, t, :]
        cur = jnp.concatenate([jnp.maximum(x_t, 0.0), jnp.maximum(-x_t, 0.0)], -1)
        v = v * V_DECAY + cur
        spk = (v >= V_THRESH).astype(jnp.float32)
        v = v - spk * V_THRESH
        m = m * M_DECAY + jnp.dot(spk, w, preferred_element_type=jnp.float32)
        outs.append(m)
    return jnp.stack(outs, axis=1)


if __name__ == "__main__":
    # Small shapes consistent with the module:
    #   batch_size=4, signal_duration=8 time steps, LDN ORDER=8, 10 classes.
    B, T, ORDER, NUM_CLASSES = 4, 8, 8, 10

    key = jax.random.PRNGKey(0)
    kx, kw = jax.random.split(key)
    x = jax.random.normal(kx, (B, T, ORDER), dtype=jnp.float32)
    # Deterministic output-layer weights (PyTorch-Linear-style scale).
    bound = 1.0 / jnp.sqrt(2.0 * ORDER)
    w = jax.random.uniform(kw, (2 * ORDER, NUM_CLASSES),
                           minval=-bound, maxval=bound, dtype=jnp.float32)

    out = lsnn_nhdn_forward(x, w)
    out = jax.block_until_ready(out)

    ref = reference_forward(x, w)
    assert out.shape == (B, T, NUM_CLASSES)
    assert jnp.allclose(out, ref, atol=1e-4, rtol=1e-4), "mismatch vs reference"

    print("KERNEL_OK")
</pallas_src>

<mosaic_0001>
module attributes {stable_mosaic.version = 11 : i64} {
  func.func @_lsnn_nhdn_kernel(%arg0: i32, %arg1: i32, %arg2: memref<8x8x8xf32, #tpu.memory_space<vmem>>, %arg3: memref<8x10xf32, #tpu.memory_space<vmem>>, %arg4: memref<8x10xf32, #tpu.memory_space<vmem>>, %arg5: memref<8x8x10xf32, #tpu.memory_space<vmem>>, %arg6: memref<8x8xf32, #tpu.memory_space<vmem>>, %arg7: memref<8x8xf32, #tpu.memory_space<vmem>>, %arg8: memref<8x10xf32, #tpu.memory_space<vmem>>, %arg9: memref<64x8xf32, #tpu.memory_space<vmem>>, %arg10: memref<64x8xf32, #tpu.memory_space<vmem>>, %arg11: memref<64x10xf32, #tpu.memory_space<vmem>>) attributes {dimension_semantics = [#tpu.dimension_semantics<parallel>, #tpu.dimension_semantics<arbitrary>], iteration_bounds = array<i64: 1, 1>, scalar_prefetch = 0 : i64, scratch_operands = 6 : i64, tpu.core_type = #tpu.core_type<tc>, window_params = [{transform_indices = @transform_0, window_bounds = array<i64: 8, 8, 8>}, {pipeline_mode = #tpu.pipeline_mode<synchronous>, transform_indices = @transform_1, window_bounds = array<i64: 8, 10>}, {pipeline_mode = #tpu.pipeline_mode<synchronous>, transform_indices = @transform_2, window_bounds = array<i64: 8, 10>}, {transform_indices = @transform_3, window_bounds = array<i64: 8, 8, 10>}]} {
    %c0_i32 = arith.constant 0 : i32
    %0 = arith.cmpi eq, %arg1, %c0_i32 : i32
    %1 = arith.extui %0 : i1 to i32
    %c0_i32_0 = arith.constant 0 : i32
    %2 = arith.cmpi ne, %1, %c0_i32_0 : i32
    scf.if %2 {
      %cst_185 = arith.constant 0.000000e+00 : f32
      %313 = vector.broadcast %cst_185 : f32 to vector<8x8xf32>
      %c0_186 = arith.constant 0 : index
      %c0_187 = arith.constant 0 : index
      %314 = vector.load %arg6[%c0_186, %c0_187] : memref<8x8xf32, #tpu.memory_space<vmem>>, vector<8x8xf32>
      tpu.vector_store %arg6[%c0_186, %c0_187], %313 {strides = array<i32>} : memref<8x8xf32, #tpu.memory_space<vmem>>, vector<8x8xf32>,
      %cst_188 = arith.constant 0.000000e+00 : f32
      %315 = vector.broadcast %cst_188 : f32 to vector<8x8xf32>
      %c0_189 = arith.constant 0 : index
      %c0_190 = arith.constant 0 : index
      %316 = vector.load %arg7[%c0_189, %c0_190] : memref<8x8xf32, #tpu.memory_space<vmem>>, vector<8x8xf32>
      tpu.vector_store %arg7[%c0_189, %c0_190], %315 {strides = array<i32>} : memref<8x8xf32, #tpu.memory_space<vmem>>, vector<8x8xf32>,
      %cst_191 = arith.constant 0.000000e+00 : f32
      %317 = vector.broadcast %cst_191 : f32 to vector<8x10xf32>
      %c0_192 = arith.constant 0 : index
      %c0_193 = arith.constant 0 : index
      %318 = vector.load %arg8[%c0_192, %c0_193] : memref<8x10xf32, #tpu.memory_space<vmem>>, vector<8x10xf32>
      tpu.vector_store %arg8[%c0_192, %c0_193], %317 {strides = array<i32>} : memref<8x10xf32, #tpu.memory_space<vmem>>, vector<8x10xf32>,
    } else {
    }
    %c0 = arith.constant 0 : index
    %c0_1 = arith.constant 0 : index
    %3 = vector.load %arg6[%c0, %c0_1] : memref<8x8xf32, #tpu.memory_space<vmem>>, vector<8x8xf32>
    %c0_2 = arith.constant 0 : index
    %c0_3 = arith.constant 0 : index
    %4 = vector.load %arg7[%c0_2, %c0_3] : memref<8x8xf32, #tpu.memory_space<vmem>>, vector<8x8xf32>
    %c0_4 = arith.constant 0 : index
    %c0_5 = arith.constant 0 : index
    %c0_6 = arith.constant 0 : index
    %5 = vector.load %arg2[%c0_4, %c0_5, %c0_6] : memref<8x8x8xf32, #tpu.memory_space<vmem>>, vector<8x1x8xf32>
    %6 = vector.shape_cast %5 : vector<8x1x8xf32> to vector<8x8xf32>
    %cst = arith.constant 0.899999976 : f32
    %7 = vector.broadcast %cst : f32 to vector<8x8xf32>
    %8 = arith.mulf %3, %7 : vector<8x8xf32>
    %cst_7 = arith.constant 0.000000e+00 : f32
    %9 = vector.broadcast %cst_7 : f32 to vector<8x8xf32>
    %10 = arith.maximumf %6, %9 : vector<8x8xf32>
    %11 = arith.addf %8, %10 : vector<8x8xf32>
    %cst_8 = arith.constant 0.899999976 : f32
    %12 = vector.broadcast %cst_8 : f32 to vector<8x8xf32>
    %13 = arith.mulf %4, %12 : vector<8x8xf32>
    %cst_9 = arith.constant 0.000000e+00 : f32
    %14 = vector.broadcast %cst_9 : f32 to vector<8x8xf32>
    %15 = arith.subf %14, %6 : vector<8x8xf32>
    %cst_10 = arith.constant 0.000000e+00 : f32
    %16 = vector.broadcast %cst_10 : f32 to vector<8x8xf32>
    %17 = arith.maximumf %15, %16 : vector<8x8xf32>
    %18 = arith.addf %13, %17 : vector<8x8xf32>
    %cst_11 = arith.constant 1.000000e+00 : f32
    %19 = vector.broadcast %cst_11 : f32 to vector<8x8xf32>
    %20 = arith.cmpf oge, %11, %19 : vector<8x8xf32>
    %21 = arith.extui %20 : vector<8x8xi1> to vector<8x8xi32>
    %22 = arith.sitofp %21 : vector<8x8xi32> to vector<8x8xf32>
    %cst_12 = arith.constant 1.000000e+00 : f32
    %23 = vector.broadcast %cst_12 : f32 to vector<8x8xf32>
    %24 = arith.cmpf oge, %18, %23 : vector<8x8xf32>
    %25 = arith.extui %24 : vector<8x8xi1> to vector<8x8xi32>
    %26 = arith.sitofp %25 : vector<8x8xi32> to vector<8x8xf32>
    %cst_13 = arith.constant 1.000000e+00 : f32
    %27 = vector.broadcast %cst_13 : f32 to vector<8x8xf32>
    %28 = arith.mulf %22, %27 : vector<8x8xf32>
    %29 = arith.subf %11, %28 : vector<8x8xf32>
    %cst_14 = arith.constant 1.000000e+00 : f32
    %30 = vector.broadcast %cst_14 : f32 to vector<8x8xf32>
    %31 = arith.mulf %26, %30 : vector<8x8xf32>
    %32 = arith.subf %18, %31 : vector<8x8xf32>
    %c0_15 = arith.constant 0 : index
    %c0_16 = arith.constant 0 : index
    %33 = vector.load %arg9[%c0_15, %c0_16] : memref<64x8xf32, #tpu.memory_space<vmem>>, vector<8x8xf32>
    tpu.vector_store %arg9[%c0_15, %c0_16], %22 {strides = array<i32>} : memref<64x8xf32, #tpu.memory_space<vmem>>, vector<8x8xf32>,
    %c0_17 = arith.constant 0 : index
    %c0_18 = arith.constant 0 : index
    %34 = vector.load %arg10[%c0_17, %c0_18] : memref<64x8xf32, #tpu.memory_space<vmem>>, vector<8x8xf32>
    tpu.vector_store %arg10[%c0_17, %c0_18], %26 {strides = array<i32>} : memref<64x8xf32, #tpu.memory_space<vmem>>, vector<8x8xf32>,
    %c0_19 = arith.constant 0 : index
    %c1 = arith.constant 1 : index
    %c0_20 = arith.constant 0 : index
    %35 = vector.load %arg2[%c0_19, %c1, %c0_20] : memref<8x8x8xf32, #tpu.memory_space<vmem>>, vector<8x1x8xf32>
    %36 = vector.shape_cast %35 : vector<8x1x8xf32> to vector<8x8xf32>
    %cst_21 = arith.constant 0.899999976 : f32
    %37 = vector.broadcast %cst_21 : f32 to vector<8x8xf32>
    %38 = arith.mulf %29, %37 : vector<8x8xf32>
    %cst_22 = arith.constant 0.000000e+00 : f32
    %39 = vector.broadcast %cst_22 : f32 to vector<8x8xf32>
    %40 = arith.maximumf %36, %39 : vector<8x8xf32>
    %41 = arith.addf %38, %40 : vector<8x8xf32>
    %cst_23 = arith.constant 0.899999976 : f32
    %42 = vector.broadcast %cst_23 : f32 to vector<8x8xf32>
    %43 = arith.mulf %32, %42 : vector<8x8xf32>
    %cst_24 = arith.constant 0.000000e+00 : f32
    %44 = vector.broadcast %cst_24 : f32 to vector<8x8xf32>
    %45 = arith.subf %44, %36 : vector<8x8xf32>
    %cst_25 = arith.constant 0.000000e+00 : f32
    %46 = vector.broadcast %cst_25 : f32 to vector<8x8xf32>
    %47 = arith.maximumf %45, %46 : vector<8x8xf32>
    %48 = arith.addf %43, %47 : vector<8x8xf32>
    %cst_26 = arith.constant 1.000000e+00 : f32
    %49 = vector.broadcast %cst_26 : f32 to vector<8x8xf32>
    %50 = arith.cmpf oge, %41, %49 : vector<8x8xf32>
    %51 = arith.extui %50 : vector<8x8xi1> to vector<8x8xi32>
    %52 = arith.sitofp %51 : vector<8x8xi32> to vector<8x8xf32>
    %cst_27 = arith.constant 1.000000e+00 : f32
    %53 = vector.broadcast %cst_27 : f32 to vector<8x8xf32>
    %54 = arith.cmpf oge, %48, %53 : vector<8x8xf32>
    %55 = arith.extui %54 : vector<8x8xi1> to vector<8x8xi32>
    %56 = arith.sitofp %55 : vector<8x8xi32> to vector<8x8xf32>
    %cst_28 = arith.constant 1.000000e+00 : f32
    %57 = vector.broadcast %cst_28 : f32 to vector<8x8xf32>
    %58 = arith.mulf %52, %57 : vector<8x8xf32>
    %59 = arith.subf %41, %58 : vector<8x8xf32>
    %cst_29 = arith.constant 1.000000e+00 : f32
    %60 = vector.broadcast %cst_29 : f32 to vector<8x8xf32>
    %61 = arith.mulf %56, %60 : vector<8x8xf32>
    %62 = arith.subf %48, %61 : vector<8x8xf32>
    %c8 = arith.constant 8 : index
    %c0_30 = arith.constant 0 : index
    %63 = vector.load %arg9[%c8, %c0_30] : memref<64x8xf32, #tpu.memory_space<vmem>>, vector<8x8xf32>
    tpu.vector_store %arg9[%c8, %c0_30], %52 {strides = array<i32>} : memref<64x8xf32, #tpu.memory_space<vmem>>, vector<8x8xf32>,
    %c8_31 = arith.constant 8 : index
    %c0_32 = arith.constant 0 : index
    %64 = vector.load %arg10[%c8_31, %c0_32] : memref<64x8xf32, #tpu.memory_space<vmem>>, vector<8x8xf32>
    tpu.vector_store %arg10[%c8_31, %c0_32], %56 {strides = array<i32>} : memref<64x8xf32, #tpu.memory_space<vmem>>, vector<8x8xf32>,
    %c0_33 = arith.constant 0 : index
    %c2 = arith.constant 2 : index
    %c0_34 = arith.constant 0 : index
    %65 = vector.load %arg2[%c0_33, %c2, %c0_34] : memref<8x8x8xf32, #tpu.memory_space<vmem>>, vector<8x1x8xf32>
    %66 = vector.shape_cast %65 : vector<8x1x8xf32> to vector<8x8xf32>
    %cst_35 = arith.constant 0.899999976 : f32
    %67 = vector.broadcast %cst_35 : f32 to vector<8x8xf32>
    %68 = arith.mulf %59, %67 : vector<8x8xf32>
    %cst_36 = arith.constant 0.000000e+00 : f32
    %69 = vector.broadcast %cst_36 : f32 to vector<8x8xf32>
    %70 = arith.maximumf %66, %69 : vector<8x8xf32>
    %71 = arith.addf %68, %70 : vector<8x8xf32>
    %cst_37 = arith.constant 0.899999976 : f32
    %72 = vector.broadcast %cst_37 : f32 to vector<8x8xf32>
    %73 = arith.mulf %62, %72 : vector<8x8xf32>
    %cst_38 = arith.constant 0.000000e+00 : f32
    %74 = vector.broadcast %cst_38 : f32 to vector<8x8xf32>
    %75 = arith.subf %74, %66 : vector<8x8xf32>
    %cst_39 = arith.constant 0.000000e+00 : f32
    %76 = vector.broadcast %cst_39 : f32 to vector<8x8xf32>
    %77 = arith.maximumf %75, %76 : vector<8x8xf32>
    %78 = arith.addf %73, %77 : vector<8x8xf32>
    %cst_40 = arith.constant 1.000000e+00 : f32
    %79 = vector.broadcast %cst_40 : f32 to vector<8x8xf32>
    %80 = arith.cmpf oge, %71, %79 : vector<8x8xf32>
    %81 = arith.extui %80 : vector<8x8xi1> to vector<8x8xi32>
    %82 = arith.sitofp %81 : vector<8x8xi32> to vector<8x8xf32>
    %cst_41 = arith.constant 1.000000e+00 : f32
    %83 = vector.broadcast %cst_41 : f32 to vector<8x8xf32>
    %84 = arith.cmpf oge, %78, %83 : vector<8x8xf32>
    %85 = arith.extui %84 : vector<8x8xi1> to vector<8x8xi32>
    %86 = arith.sitofp %85 : vector<8x8xi32> to vector<8x8xf32>
    %cst_42 = arith.constant 1.000000e+00 : f32
    %87 = vector.broadcast %cst_42 : f32 to vector<8x8xf32>
    %88 = arith.mulf %82, %87 : vector<8x8xf32>
    %89 = arith.subf %71, %88 : vector<8x8xf32>
    %cst_43 = arith.constant 1.000000e+00 : f32
    %90 = vector.broadcast %cst_43 : f32 to vector<8x8xf32>
    %91 = arith.mulf %86, %90 : vector<8x8xf32>
    %92 = arith.subf %78, %91 : vector<8x8xf32>
    %c16 = arith.constant 16 : index
    %c0_44 = arith.constant 0 : index
    %93 = vector.load %arg9[%c16, %c0_44] : memref<64x8xf32, #tpu.memory_space<vmem>>, vector<8x8xf32>
    tpu.vector_store %arg9[%c16, %c0_44], %82 {strides = array<i32>} : memref<64x8xf32, #tpu.memory_space<vmem>>, vector<8x8xf32>,
    %c16_45 = arith.constant 16 : index
    %c0_46 = arith.constant 0 : index
    %94 = vector.load %arg10[%c16_45, %c0_46] : memref<64x8xf32, #tpu.memory_space<vmem>>, vector<8x8xf32>
    tpu.vector_store %arg10[%c16_45, %c0_46], %86 {strides = array<i32>} : memref<64x8xf32, #tpu.memory_space<vmem>>, vector<8x8xf32>,
    %c0_47 = arith.constant 0 : index
    %c3 = arith.constant 3 : index
    %c0_48 = arith.constant 0 : index
    %95 = vector.load %arg2[%c0_47, %c3, %c0_48] : memref<8x8x8xf32, #tpu.memory_space<vmem>>, vector<8x1x8xf32>
    %96 = vector.shape_cast %95 : vector<8x1x8xf32> to vector<8x8xf32>
    %cst_49 = arith.constant 0.899999976 : f32
    %97 = vector.broadcast %cst_49 : f32 to vector<8x8xf32>
    %98 = arith.mulf %89, %97 : vector<8x8xf32>
    %cst_50 = arith.constant 0.000000e+00 : f32
    %99 = vector.broadcast %cst_50 : f32 to vector<8x8xf32>
    %100 = arith.maximumf %96, %99 : vector<8x8xf32>
    %101 = arith.addf %98, %100 : vector<8x8xf32>
    %cst_51 = arith.constant 0.899999976 : f32
    %102 = vector.broadcast %cst_51 : f32 to vector<8x8xf32>
    %103 = arith.mulf %92, %102 : vector<8x8xf32>
    %cst_52 = arith.constant 0.000000e+00 : f32
    %104 = vector.broadcast %cst_52 : f32 to vector<8x8xf32>
    %105 = arith.subf %104, %96 : vector<8x8xf32>
    %cst_53 = arith.constant 0.000000e+00 : f32
    %106 = vector.broadcast %cst_53 : f32 to vector<8x8xf32>
    %107 = arith.maximumf %105, %106 : vector<8x8xf32>
    %108 = arith.addf %103, %107 : vector<8x8xf32>
    %cst_54 = arith.constant 1.000000e+00 : f32
    %109 = vector.broadcast %cst_54 : f32 to vector<8x8xf32>
    %110 = arith.cmpf oge, %101, %109 : vector<8x8xf32>
    %111 = arith.extui %110 : vector<8x8xi1> to vector<8x8xi32>
    %112 = arith.sitofp %111 : vector<8x8xi32> to vector<8x8xf32>
    %cst_55 = arith.constant 1.000000e+00 : f32
    %113 = vector.broadcast %cst_55 : f32 to vector<8x8xf32>
    %114 = arith.cmpf oge, %108, %113 : vector<8x8xf32>
    %115 = arith.extui %114 : vector<8x8xi1> to vector<8x8xi32>
    %116 = arith.sitofp %115 : vector<8x8xi32> to vector<8x8xf32>
    %cst_56 = arith.constant 1.000000e+00 : f32
    %117 = vector.broadcast %cst_56 : f32 to vector<8x8xf32>
    %118 = arith.mulf %112, %117 : vector<8x8xf32>
    %119 = arith.subf %101, %118 : vector<8x8xf32>
    %cst_57 = arith.constant 1.000000e+00 : f32
    %120 = vector.broadcast %cst_57 : f32 to vector<8x8xf32>
    %121 = arith.mulf %116, %120 : vector<8x8xf32>
    %122 = arith.subf %108, %121 : vector<8x8xf32>
    %c24 = arith.constant 24 : index
    %c0_58 = arith.constant 0 : index
    %123 = vector.load %arg9[%c24, %c0_58] : memref<64x8xf32, #tpu.memory_space<vmem>>, vector<8x8xf32>
    tpu.vector_store %arg9[%c24, %c0_58], %112 {strides = array<i32>} : memref<64x8xf32, #tpu.memory_space<vmem>>, vector<8x8xf32>,
    %c24_59 = arith.constant 24 : index
    %c0_60 = arith.constant 0 : index
    %124 = vector.load %arg10[%c24_59, %c0_60] : memref<64x8xf32, #tpu.memory_space<vmem>>, vector<8x8xf32>
    tpu.vector_store %arg10[%c24_59, %c0_60], %116 {strides = array<i32>} : memref<64x8xf32, #tpu.memory_space<vmem>>, vector<8x8xf32>,
    %c0_61 = arith.constant 0 : index
    %c4 = arith.constant 4 : index
    %c0_62 = arith.constant 0 : index
    %125 = vector.load %arg2[%c0_61, %c4, %c0_62] : memref<8x8x8xf32, #tpu.memory_space<vmem>>, vector<8x1x8xf32>
    %126 = vector.shape_cast %125 : vector<8x1x8xf32> to vector<8x8xf32>
    %cst_63 = arith.constant 0.899999976 : f32
    %127 = vector.broadcast %cst_63 : f32 to vector<8x8xf32>
    %128 = arith.mulf %119, %127 : vector<8x8xf32>
    %cst_64 = arith.constant 0.000000e+00 : f32
    %129 = vector.broadcast %cst_64 : f32 to vector<8x8xf32>
    %130 = arith.maximumf %126, %129 : vector<8x8xf32>
    %131 = arith.addf %128, %130 : vector<8x8xf32>
    %cst_65 = arith.constant 0.899999976 : f32
    %132 = vector.broadcast %cst_65 : f32 to vector<8x8xf32>
    %133 = arith.mulf %122, %132 : vector<8x8xf32>
    %cst_66 = arith.constant 0.000000e+00 : f32
    %134 = vector.broadcast %cst_66 : f32 to vector<8x8xf32>
    %135 = arith.subf %134, %126 : vector<8x8xf32>
    %cst_67 = arith.constant 0.000000e+00 : f32
    %136 = vector.broadcast %cst_67 : f32 to vector<8x8xf32>
    %137 = arith.maximumf %135, %136 : vector<8x8xf32>
    %138 = arith.addf %133, %137 : vector<8x8xf32>
    %cst_68 = arith.constant 1.000000e+00 : f32
    %139 = vector.broadcast %cst_68 : f32 to vector<8x8xf32>
    %140 = arith.cmpf oge, %131, %139 : vector<8x8xf32>
    %141 = arith.extui %140 : vector<8x8xi1> to vector<8x8xi32>
    %142 = arith.sitofp %141 : vector<8x8xi32> to vector<8x8xf32>
    %cst_69 = arith.constant 1.000000e+00 : f32
    %143 = vector.broadcast %cst_69 : f32 to vector<8x8xf32>
    %144 = arith.cmpf oge, %138, %143 : vector<8x8xf32>
    %145 = arith.extui %144 : vector<8x8xi1> to vector<8x8xi32>
    %146 = arith.sitofp %145 : vector<8x8xi32> to vector<8x8xf32>
    %cst_70 = arith.constant 1.000000e+00 : f32
    %147 = vector.broadcast %cst_70 : f32 to vector<8x8xf32>
    %148 = arith.mulf %142, %147 : vector<8x8xf32>
    %149 = arith.subf %131, %148 : vector<8x8xf32>
    %cst_71 = arith.constant 1.000000e+00 : f32
    %150 = vector.broadcast %cst_71 : f32 to vector<8x8xf32>
    %151 = arith.mulf %146, %150 : vector<8x8xf32>
    %152 = arith.subf %138, %151 : vector<8x8xf32>
    %c32 = arith.constant 32 : index
    %c0_72 = arith.constant 0 : index
    %153 = vector.load %arg9[%c32, %c0_72] : memref<64x8xf32, #tpu.memory_space<vmem>>, vector<8x8xf32>
    tpu.vector_store %arg9[%c32, %c0_72], %142 {strides = array<i32>} : memref<64x8xf32, #tpu.memory_space<vmem>>, vector<8x8xf32>,
    %c32_73 = arith.constant 32 : index
    %c0_74 = arith.constant 0 : index
    %154 = vector.load %arg10[%c32_73, %c0_74] : memref<64x8xf32, #tpu.memory_space<vmem>>, vector<8x8xf32>
    tpu.vector_store %arg10[%c32_73, %c0_74], %146 {strides = array<i32>} : memref<64x8xf32, #tpu.memory_space<vmem>>, vector<8x8xf32>,
    %c0_75 = arith.constant 0 : index
    %c5 = arith.constant 5 : index
    %c0_76 = arith.constant 0 : index
    %155 = vector.load %arg2[%c0_75, %c5, %c0_76] : memref<8x8x8xf32, #tpu.memory_space<vmem>>, vector<8x1x8xf32>
    %156 = vector.shape_cast %155 : vector<8x1x8xf32> to vector<8x8xf32>
    %cst_77 = arith.constant 0.899999976 : f32
    %157 = vector.broadcast %cst_77 : f32 to vector<8x8xf32>
    %158 = arith.mulf %149, %157 : vector<8x8xf32>
    %cst_78 = arith.constant 0.000000e+00 : f32
    %159 = vector.broadcast %cst_78 : f32 to vector<8x8xf32>
    %160 = arith.maximumf %156, %159 : vector<8x8xf32>
    %161 = arith.addf %158, %160 : vector<8x8xf32>
    %cst_79 = arith.constant 0.899999976 : f32
    %162 = vector.broadcast %cst_79 : f32 to vector<8x8xf32>
    %163 = arith.mulf %152, %162 : vector<8x8xf32>
    %cst_80 = arith.constant 0.000000e+00 : f32
    %164 = vector.broadcast %cst_80 : f32 to vector<8x8xf32>
    %165 = arith.subf %164, %156 : vector<8x8xf32>
    %cst_81 = arith.constant 0.000000e+00 : f32
    %166 = vector.broadcast %cst_81 : f32 to vector<8x8xf32>
    %167 = arith.maximumf %165, %166 : vector<8x8xf32>
    %168 = arith.addf %163, %167 : vector<8x8xf32>
    %cst_82 = arith.constant 1.000000e+00 : f32
    %169 = vector.broadcast %cst_82 : f32 to vector<8x8xf32>
    %170 = arith.cmpf oge, %161, %169 : vector<8x8xf32>
    %171 = arith.extui %170 : vector<8x8xi1> to vector<8x8xi32>
    %172 = arith.sitofp %171 : vector<8x8xi32> to vector<8x8xf32>
    %cst_83 = arith.constant 1.000000e+00 : f32
    %173 = vector.broadcast %cst_83 : f32 to vector<8x8xf32>
    %174 = arith.cmpf oge, %168, %173 : vector<8x8xf32>
    %175 = arith.extui %174 : vector<8x8xi1> to vector<8x8xi32>
    %176 = arith.sitofp %175 : vector<8x8xi32> to vector<8x8xf32>
    %cst_84 = arith.constant 1.000000e+00 : f32
    %177 = vector.broadcast %cst_84 : f32 to vector<8x8xf32>
    %178 = arith.mulf %172, %177 : vector<8x8xf32>
    %179 = arith.subf %161, %178 : vector<8x8xf32>
    %cst_85 = arith.constant 1.000000e+00 : f32
    %180 = vector.broadcast %cst_85 : f32 to vector<8x8xf32>
    %181 = arith.mulf %176, %180 : vector<8x8xf32>
    %182 = arith.subf %168, %181 : vector<8x8xf32>
    %c40 = arith.constant 40 : index
    %c0_86 = arith.constant 0 : index
    %183 = vector.load %arg9[%c40, %c0_86] : memref<64x8xf32, #tpu.memory_space<vmem>>, vector<8x8xf32>
    tpu.vector_store %arg9[%c40, %c0_86], %172 {strides = array<i32>} : memref<64x8xf32, #tpu.memory_space<vmem>>, vector<8x8xf32>,
    %c40_87 = arith.constant 40 : index
    %c0_88 = arith.constant 0 : index
    %184 = vector.load %arg10[%c40_87, %c0_88] : memref<64x8xf32, #tpu.memory_space<vmem>>, vector<8x8xf32>
    tpu.vector_store %arg10[%c40_87, %c0_88], %176 {strides = array<i32>} : memref<64x8xf32, #tpu.memory_space<vmem>>, vector<8x8xf32>,
    %c0_89 = arith.constant 0 : index
    %c6 = arith.constant 6 : index
    %c0_90 = arith.constant 0 : index
    %185 = vector.load %arg2[%c0_89, %c6, %c0_90] : memref<8x8x8xf32, #tpu.memory_space<vmem>>, vector<8x1x8xf32>
    %186 = vector.shape_cast %185 : vector<8x1x8xf32> to vector<8x8xf32>
    %cst_91 = arith.constant 0.899999976 : f32
    %187 = vector.broadcast %cst_91 : f32 to vector<8x8xf32>
    %188 = arith.mulf %179, %187 : vector<8x8xf32>
    %cst_92 = arith.constant 0.000000e+00 : f32
    %189 = vector.broadcast %cst_92 : f32 to vector<8x8xf32>
    %190 = arith.maximumf %186, %189 : vector<8x8xf32>
    %191 = arith.addf %188, %190 : vector<8x8xf32>
    %cst_93 = arith.constant 0.899999976 : f32
    %192 = vector.broadcast %cst_93 : f32 to vector<8x8xf32>
    %193 = arith.mulf %182, %192 : vector<8x8xf32>
    %cst_94 = arith.constant 0.000000e+00 : f32
    %194 = vector.broadcast %cst_94 : f32 to vector<8x8xf32>
    %195 = arith.subf %194, %186 : vector<8x8xf32>
    %cst_95 = arith.constant 0.000000e+00 : f32
    %196 = vector.broadcast %cst_95 : f32 to vector<8x8xf32>
    %197 = arith.maximumf %195, %196 : vector<8x8xf32>
    %198 = arith.addf %193, %197 : vector<8x8xf32>
    %cst_96 = arith.constant 1.000000e+00 : f32
    %199 = vector.broadcast %cst_96 : f32 to vector<8x8xf32>
    %200 = arith.cmpf oge, %191, %199 : vector<8x8xf32>
    %201 = arith.extui %200 : vector<8x8xi1> to vector<8x8xi32>
    %202 = arith.sitofp %201 : vector<8x8xi32> to vector<8x8xf32>
    %cst_97 = arith.constant 1.000000e+00 : f32
    %203 = vector.broadcast %cst_97 : f32 to vector<8x8xf32>
    %204 = arith.cmpf oge, %198, %203 : vector<8x8xf32>
    %205 = arith.extui %204 : vector<8x8xi1> to vector<8x8xi32>
    %206 = arith.sitofp %205 : vector<8x8xi32> to vector<8x8xf32>
    %cst_98 = arith.constant 1.000000e+00 : f32
    %207 = vector.broadcast %cst_98 : f32 to vector<8x8xf32>
    %208 = arith.mulf %202, %207 : vector<8x8xf32>
    %209 = arith.subf %191, %208 : vector<8x8xf32>
    %cst_99 = arith.constant 1.000000e+00 : f32
    %210 = vector.broadcast %cst_99 : f32 to vector<8x8xf32>
    %211 = arith.mulf %206, %210 : vector<8x8xf32>
    %212 = arith.subf %198, %211 : vector<8x8xf32>
    %c48 = arith.constant 48 : index
    %c0_100 = arith.constant 0 : index
    %213 = vector.load %arg9[%c48, %c0_100] : memref<64x8xf32, #tpu.memory_space<vmem>>, vector<8x8xf32>
    tpu.vector_store %arg9[%c48, %c0_100], %202 {strides = array<i32>} : memref<64x8xf32, #tpu.memory_space<vmem>>, vector<8x8xf32>,
    %c48_101 = arith.constant 48 : index
    %c0_102 = arith.constant 0 : index
    %214 = vector.load %arg10[%c48_101, %c0_102] : memref<64x8xf32, #tpu.memory_space<vmem>>, vector<8x8xf32>
    tpu.vector_store %arg10[%c48_101, %c0_102], %206 {strides = array<i32>} : memref<64x8xf32, #tpu.memory_space<vmem>>, vector<8x8xf32>,
    %c0_103 = arith.constant 0 : index
    %c7 = arith.constant 7 : index
    %c0_104 = arith.constant 0 : index
    %215 = vector.load %arg2[%c0_103, %c7, %c0_104] : memref<8x8x8xf32, #tpu.memory_space<vmem>>, vector<8x1x8xf32>
    %216 = vector.shape_cast %215 : vector<8x1x8xf32> to vector<8x8xf32>
    %cst_105 = arith.constant 0.899999976 : f32
    %217 = vector.broadcast %cst_105 : f32 to vector<8x8xf32>
    %218 = arith.mulf %209, %217 : vector<8x8xf32>
    %cst_106 = arith.constant 0.000000e+00 : f32
    %219 = vector.broadcast %cst_106 : f32 to vector<8x8xf32>
    %220 = arith.maximumf %216, %219 : vector<8x8xf32>
    %221 = arith.addf %218, %220 : vector<8x8xf32>
    %cst_107 = arith.constant 0.899999976 : f32
    %222 = vector.broadcast %cst_107 : f32 to vector<8x8xf32>
    %223 = arith.mulf %212, %222 : vector<8x8xf32>
    %cst_108 = arith.constant 0.000000e+00 : f32
    %224 = vector.broadcast %cst_108 : f32 to vector<8x8xf32>
    %225 = arith.subf %224, %216 : vector<8x8xf32>
    %cst_109 = arith.constant 0.000000e+00 : f32
    %226 = vector.broadcast %cst_109 : f32 to vector<8x8xf32>
    %227 = arith.maximumf %225, %226 : vector<8x8xf32>
    %228 = arith.addf %223, %227 : vector<8x8xf32>
    %cst_110 = arith.constant 1.000000e+00 : f32
    %229 = vector.broadcast %cst_110 : f32 to vector<8x8xf32>
    %230 = arith.cmpf oge, %221, %229 : vector<8x8xf32>
    %231 = arith.extui %230 : vector<8x8xi1> to vector<8x8xi32>
    %232 = arith.sitofp %231 : vector<8x8xi32> to vector<8x8xf32>
    %cst_111 = arith.constant 1.000000e+00 : f32
    %233 = vector.broadcast %cst_111 : f32 to vector<8x8xf32>
    %234 = arith.cmpf oge, %228, %233 : vector<8x8xf32>
    %235 = arith.extui %234 : vector<8x8xi1> to vector<8x8xi32>
    %236 = arith.sitofp %235 : vector<8x8xi32> to vector<8x8xf32>
    %cst_112 = arith.constant 1.000000e+00 : f32
    %237 = vector.broadcast %cst_112 : f32 to vector<8x8xf32>
    %238 = arith.mulf %232, %237 : vector<8x8xf32>
    %239 = arith.subf %221, %238 : vector<8x8xf32>
    %cst_113 = arith.constant 1.000000e+00 : f32
    %240 = vector.broadcast %cst_113 : f32 to vector<8x8xf32>
    %241 = arith.mulf %236, %240 : vector<8x8xf32>
    %242 = arith.subf %228, %241 : vector<8x8xf32>
    %c56 = arith.constant 56 : index
    %c0_114 = arith.constant 0 : index
    %243 = vector.load %arg9[%c56, %c0_114] : memref<64x8xf32, #tpu.memory_space<vmem>>, vector<8x8xf32>
    tpu.vector_store %arg9[%c56, %c0_114], %232 {strides = array<i32>} : memref<64x8xf32, #tpu.memory_space<vmem>>, vector<8x8xf32>,
    %c56_115 = arith.constant 56 : index
    %c0_116 = arith.constant 0 : index
    %244 = vector.load %arg10[%c56_115, %c0_116] : memref<64x8xf32, #tpu.memory_space<vmem>>, vector<8x8xf32>
    tpu.vector_store %arg10[%c56_115, %c0_116], %236 {strides = array<i32>} : memref<64x8xf32, #tpu.memory_space<vmem>>, vector<8x8xf32>,
    %c0_117 = arith.constant 0 : index
    %c0_118 = arith.constant 0 : index
    %245 = vector.load %arg6[%c0_117, %c0_118] : memref<8x8xf32, #tpu.memory_space<vmem>>, vector<8x8xf32>
    tpu.vector_store %arg6[%c0_117, %c0_118], %239 {strides = array<i32>} : memref<8x8xf32, #tpu.memory_space<vmem>>, vector<8x8xf32>,
    %c0_119 = arith.constant 0 : index
    %c0_120 = arith.constant 0 : index
    %246 = vector.load %arg7[%c0_119, %c0_120] : memref<8x8xf32, #tpu.memory_space<vmem>>, vector<8x8xf32>
    tpu.vector_store %arg7[%c0_119, %c0_120], %242 {strides = array<i32>} : memref<8x8xf32, #tpu.memory_space<vmem>>, vector<8x8xf32>,
    %c0_121 = arith.constant 0 : index
    %c0_122 = arith.constant 0 : index
    %247 = vector.load %arg9[%c0_121, %c0_122] : memref<64x8xf32, #tpu.memory_space<vmem>>, vector<64x8xf32>
    %c0_123 = arith.constant 0 : index
    %c0_124 = arith.constant 0 : index
    %248 = vector.load %arg10[%c0_123, %c0_124] : memref<64x8xf32, #tpu.memory_space<vmem>>, vector<64x8xf32>
    %c0_125 = arith.constant 0 : index
    %c0_126 = arith.constant 0 : index
    %249 = vector.load %arg3[%c0_125, %c0_126] : memref<8x10xf32, #tpu.memory_space<vmem>>, vector<8x10xf32>
    %c0_127 = arith.constant 0 : index
    %c0_128 = arith.constant 0 : index
    %250 = vector.load %arg4[%c0_127, %c0_128] : memref<8x10xf32, #tpu.memory_space<vmem>>, vector<8x10xf32>
    %cst_129 = arith.constant dense<0.000000e+00> : vector<64x10xf32>
    %251 = tpu.matmul %247, %249, %cst_129 {dimension_numbers = #tpu.dot_dimension_numbers<[1], [0], [0], [1], [0, 0, 1, 1], [], []>} : vector<64x8xf32>, vector<8x10xf32>, vector<64x10xf32> -> vector<64x10xf32>
    %cst_130 = arith.constant dense<0.000000e+00> : vector<64x10xf32>
    %252 = tpu.matmul %248, %250, %cst_130 {dimension_numbers = #tpu.dot_dimension_numbers<[1], [0], [0], [1], [0, 0, 1, 1], [], []>} : vector<64x8xf32>, vector<8x10xf32>, vector<64x10xf32> -> vector<64x10xf32>
    %253 = arith.addf %251, %252 : vector<64x10xf32>
    %c0_131 = arith.constant 0 : index
    %c0_132 = arith.constant 0 : index
    %254 = vector.load %arg11[%c0_131, %c0_132] : memref<64x10xf32, #tpu.memory_space<vmem>>, vector<64x10xf32>
    tpu.vector_store %arg11[%c0_131, %c0_132], %253 {strides = array<i32>} : memref<64x10xf32, #tpu.memory_space<vmem>>, vector<64x10xf32>,
    %c0_133 = arith.constant 0 : index
    %c0_134 = arith.constant 0 : index
    %255 = vector.load %arg8[%c0_133, %c0_134] : memref<8x10xf32, #tpu.memory_space<vmem>>, vector<8x10xf32>
    %cst_135 = arith.constant 0.899999976 : f32
    %256 = vector.broadcast %cst_135 : f32 to vector<8x10xf32>
    %257 = arith.mulf %255, %256 : vector<8x10xf32>
    %c0_136 = arith.constant 0 : index
    %c0_137 = arith.constant 0 : index
    %258 = vector.load %arg11[%c0_136, %c0_137] : memref<64x10xf32, #tpu.memory_space<vmem>>, vector<8x10xf32>
    %259 = arith.addf %257, %258 : vector<8x10xf32>
    %c0_138 = arith.constant 0 : index
    %c0_139 = arith.constant 0 : index
    %c0_140 = arith.constant 0 : index
    %260 = vector.load %arg5[%c0_138, %c0_139, %c0_140] : memref<8x8x10xf32, #tpu.memory_space<vmem>>, vector<8x1x10xf32>
    %261 = vector.shape_cast %260 : vector<8x1x10xf32> to vector<8x10xf32>
    %262 = vector.shape_cast %259 : vector<8x10xf32> to vector<8x1x10xf32>
    tpu.vector_store %arg5[%c0_138, %c0_139, %c0_140], %262 {strides = array<i32>} : memref<8x8x10xf32, #tpu.memory_space<vmem>>, vector<8x1x10xf32>,
    %cst_141 = arith.constant 0.899999976 : f32
    %263 = vector.broadcast %cst_141 : f32 to vector<8x10xf32>
    %264 = arith.mulf %259, %263 : vector<8x10xf32>
    %c8_142 = arith.constant 8 : index
    %c0_143 = arith.constant 0 : index
    %265 = vector.load %arg11[%c8_142, %c0_143] : memref<64x10xf32, #tpu.memory_space<vmem>>, vector<8x10xf32>
    %266 = arith.addf %264, %265 : vector<8x10xf32>
    %c0_144 = arith.constant 0 : index
    %c1_145 = arith.constant 1 : index
    %c0_146 = arith.constant 0 : index
    %267 = vector.load %arg5[%c0_144, %c1_145, %c0_146] : memref<8x8x10xf32, #tpu.memory_space<vmem>>, vector<8x1x10xf32>
    %268 = vector.shape_cast %267 : vector<8x1x10xf32> to vector<8x10xf32>
    %269 = vector.shape_cast %266 : vector<8x10xf32> to vector<8x1x10xf32>
    tpu.vector_store %arg5[%c0_144, %c1_145, %c0_146], %269 {strides = array<i32>} : memref<8x8x10xf32, #tpu.memory_space<vmem>>, vector<8x1x10xf32>,
    %cst_147 = arith.constant 0.899999976 : f32
    %270 = vector.broadcast %cst_147 : f32 to vector<8x10xf32>
    %271 = arith.mulf %266, %270 : vector<8x10xf32>
    %c16_148 = arith.constant 16 : index
    %c0_149 = arith.constant 0 : index
    %272 = vector.load %arg11[%c16_148, %c0_149] : memref<64x10xf32, #tpu.memory_space<vmem>>, vector<8x10xf32>
    %273 = arith.addf %271, %272 : vector<8x10xf32>
    %c0_150 = arith.constant 0 : index
    %c2_151 = arith.constant 2 : index
    %c0_152 = arith.constant 0 : index
    %274 = vector.load %arg5[%c0_150, %c2_151, %c0_152] : memref<8x8x10xf32, #tpu.memory_space<vmem>>, vector<8x1x10xf32>
    %275 = vector.shape_cast %274 : vector<8x1x10xf32> to vector<8x10xf32>
    %276 = vector.shape_cast %273 : vector<8x10xf32> to vector<8x1x10xf32>
    tpu.vector_store %arg5[%c0_150, %c2_151, %c0_152], %276 {strides = array<i32>} : memref<8x8x10xf32, #tpu.memory_space<vmem>>, vector<8x1x10xf32>,
    %cst_153 = arith.constant 0.899999976 : f32
    %277 = vector.broadcast %cst_153 : f32 to vector<8x10xf32>
    %278 = arith.mulf %273, %277 : vector<8x10xf32>
    %c24_154 = arith.constant 24 : index
    %c0_155 = arith.constant 0 : index
    %279 = vector.load %arg11[%c24_154, %c0_155] : memref<64x10xf32, #tpu.memory_space<vmem>>, vector<8x10xf32>
    %280 = arith.addf %278, %279 : vector<8x10xf32>
    %c0_156 = arith.constant 0 : index
    %c3_157 = arith.constant 3 : index
    %c0_158 = arith.constant 0 : index
    %281 = vector.load %arg5[%c0_156, %c3_157, %c0_158] : memref<8x8x10xf32, #tpu.memory_space<vmem>>, vector<8x1x10xf32>
    %282 = vector.shape_cast %281 : vector<8x1x10xf32> to vector<8x10xf32>
    %283 = vector.shape_cast %280 : vector<8x10xf32> to vector<8x1x10xf32>
    tpu.vector_store %arg5[%c0_156, %c3_157, %c0_158], %283 {strides = array<i32>} : memref<8x8x10xf32, #tpu.memory_space<vmem>>, vector<8x1x10xf32>,
    %cst_159 = arith.constant 0.899999976 : f32
    %284 = vector.broadcast %cst_159 : f32 to vector<8x10xf32>
    %285 = arith.mulf %280, %284 : vector<8x10xf32>
    %c32_160 = arith.constant 32 : index
    %c0_161 = arith.constant 0 : index
    %286 = vector.load %arg11[%c32_160, %c0_161] : memref<64x10xf32, #tpu.memory_space<vmem>>, vector<8x10xf32>
    %287 = arith.addf %285, %286 : vector<8x10xf32>
    %c0_162 = arith.constant 0 : index
    %c4_163 = arith.constant 4 : index
    %c0_164 = arith.constant 0 : index
    %288 = vector.load %arg5[%c0_162, %c4_163, %c0_164] : memref<8x8x10xf32, #tpu.memory_space<vmem>>, vector<8x1x10xf32>
    %289 = vector.shape_cast %288 : vector<8x1x10xf32> to vector<8x10xf32>
    %290 = vector.shape_cast %287 : vector<8x10xf32> to vector<8x1x10xf32>
    tpu.vector_store %arg5[%c0_162, %c4_163, %c0_164], %290 {strides = array<i32>} : memref<8x8x10xf32, #tpu.memory_space<vmem>>, vector<8x1x10xf32>,
    %cst_165 = arith.constant 0.899999976 : f32
    %291 = vector.broadcast %cst_165 : f32 to vector<8x10xf32>
    %292 = arith.mulf %287, %291 : vector<8x10xf32>
    %c40_166 = arith.constant 40 : index
    %c0_167 = arith.constant 0 : index
    %293 = vector.load %arg11[%c40_166, %c0_167] : memref<64x10xf32, #tpu.memory_space<vmem>>, vector<8x10xf32>
    %294 = arith.addf %292, %293 : vector<8x10xf32>
    %c0_168 = arith.constant 0 : index
    %c5_169 = arith.constant 5 : index
    %c0_170 = arith.constant 0 : index
    %295 = vector.load %arg5[%c0_168, %c5_169, %c0_170] : memref<8x8x10xf32, #tpu.memory_space<vmem>>, vector<8x1x10xf32>
    %296 = vector.shape_cast %295 : vector<8x1x10xf32> to vector<8x10xf32>
    %297 = vector.shape_cast %294 : vector<8x10xf32> to vector<8x1x10xf32>
    tpu.vector_store %arg5[%c0_168, %c5_169, %c0_170], %297 {strides = array<i32>} : memref<8x8x10xf32, #tpu.memory_space<vmem>>, vector<8x1x10xf32>,
    %cst_171 = arith.constant 0.899999976 : f32
    %298 = vector.broadcast %cst_171 : f32 to vector<8x10xf32>
    %299 = arith.mulf %294, %298 : vector<8x10xf32>
    %c48_172 = arith.constant 48 : index
    %c0_173 = arith.constant 0 : index
    %300 = vector.load %arg11[%c48_172, %c0_173] : memref<64x10xf32, #tpu.memory_space<vmem>>, vector<8x10xf32>
    %301 = arith.addf %299, %300 : vector<8x10xf32>
    %c0_174 = arith.constant 0 : index
    %c6_175 = arith.constant 6 : index
    %c0_176 = arith.constant 0 : index
    %302 = vector.load %arg5[%c0_174, %c6_175, %c0_176] : memref<8x8x10xf32, #tpu.memory_space<vmem>>, vector<8x1x10xf32>
    %303 = vector.shape_cast %302 : vector<8x1x10xf32> to vector<8x10xf32>
    %304 = vector.shape_cast %301 : vector<8x10xf32> to vector<8x1x10xf32>
    tpu.vector_store %arg5[%c0_174, %c6_175, %c0_176], %304 {strides = array<i32>} : memref<8x8x10xf32, #tpu.memory_space<vmem>>, vector<8x1x10xf32>,
    %cst_177 = arith.constant 0.899999976 : f32
    %305 = vector.broadcast %cst_177 : f32 to vector<8x10xf32>
    %306 = arith.mulf %301, %305 : vector<8x10xf32>
    %c56_178 = arith.constant 56 : index
    %c0_179 = arith.constant 0 : index
    %307 = vector.load %arg11[%c56_178, %c0_179] : memref<64x10xf32, #tpu.memory_space<vmem>>, vector<8x10xf32>
    %308 = arith.addf %306, %307 : vector<8x10xf32>
    %c0_180 = arith.constant 0 : index
    %c7_181 = arith.constant 7 : index
    %c0_182 = arith.constant 0 : index
    %309 = vector.load %arg5[%c0_180, %c7_181, %c0_182] : memref<8x8x10xf32, #tpu.memory_space<vmem>>, vector<8x1x10xf32>
    %310 = vector.shape_cast %309 : vector<8x1x10xf32> to vector<8x10xf32>
    %311 = vector.shape_cast %308 : vector<8x10xf32> to vector<8x1x10xf32>
    tpu.vector_store %arg5[%c0_180, %c7_181, %c0_182], %311 {strides = array<i32>} : memref<8x8x10xf32, #tpu.memory_space<vmem>>, vector<8x1x10xf32>,
    %c0_183 = arith.constant 0 : index
    %c0_184 = arith.constant 0 : index
    %312 = vector.load %arg8[%c0_183, %c0_184] : memref<8x10xf32, #tpu.memory_space<vmem>>, vector<8x10xf32>
    tpu.vector_store %arg8[%c0_183, %c0_184], %308 {strides = array<i32>} : memref<8x10xf32, #tpu.memory_space<vmem>>, vector<8x10xf32>,
    return
  }
  func.func @transform_0(%arg0: i32, %arg1: i32) -> (i32, i32, i32) {
    %c0_i32 = arith.constant 0 : i32
    %c0_i32_0 = arith.constant 0 : i32
    return %arg0, %arg1, %c0_i32 : i32, i32, i32
  }
  func.func @transform_1(%arg0: i32, %arg1: i32) -> (i32, i32) {
    %c0_i32 = arith.constant 0 : i32
    %c0_i32_0 = arith.constant 0 : i32
    %c0_i32_1 = arith.constant 0 : i32
    return %c0_i32, %c0_i32_0 : i32, i32
  }
  func.func @transform_2(%arg0: i32, %arg1: i32) -> (i32, i32) {
    %c0_i32 = arith.constant 0 : i32
    %c0_i32_0 = arith.constant 0 : i32
    %c0_i32_1 = arith.constant 0 : i32
    return %c0_i32, %c0_i32_0 : i32, i32
  }
  func.func @transform_3(%arg0: i32, %arg1: i32) -> (i32, i32, i32) {
    %c0_i32 = arith.constant 0 : i32
    %c0_i32_0 = arith.constant 0 : i32
    return %arg0, %arg1, %c0_i32 : i32, i32, i32
  }
}

</mosaic_0001>

<llo_original>
// kernel: tpu_custom_call.1
$region0: #{tpu_custom_call.1}
  #allocation0 [shape = 'u32[]', space=smem, size = 0x4, offset = 0x4, fixed_abs, tag = 'smem constant byte address 0x4 - core index']
  #allocation1 [shape = 'u32[144,128]{1,0:T(1,128)}', space=vmem, size = 0x12000, scoped, tag = 'internal scratch']
  #allocation2 [shape = 'f32[8,8]{1,0:T(8,128)}', space=vmem, size = 0x1000, scoped, tag = 'scratch operand']
  #allocation3 [shape = 'f32[8,8]{1,0:T(8,128)}', space=vmem, size = 0x1000, scoped, tag = 'scratch operand']
  #allocation4 [shape = 'f32[8,10]{1,0:T(8,128)}', space=vmem, size = 0x1000, scoped, tag = 'scratch operand']
  #allocation5 [shape = 'f32[64,8]{1,0:T(8,128)}', space=vmem, size = 0x8000, scoped, tag = 'scratch operand']
  #allocation6 [shape = 'f32[64,8]{1,0:T(8,128)}', space=vmem, size = 0x8000, scoped, tag = 'scratch operand']
  #allocation7 [shape = 'f32[64,10]{1,0:T(8,128)}', space=vmem, size = 0x8000, scoped, tag = 'scratch operand']
  %s0 = inlined_call_operand.hbm [shape: f32[8,8,8], index: 0, kind: input, shape index: {}]
  %s1 = inlined_call_operand.hbm [shape: f32[8,10], index: 1, kind: input, shape index: {}]
  %s2 = inlined_call_operand.hbm [shape: f32[8,10], index: 2, kind: input, shape index: {}]
  %s3 = inlined_call_operand.hbm [shape: f32[8,8,10], index: 3, kind: output, shape index: {}]
  %s4 = sld [smem:[#allocation0]]
  $region38: #{tpu_custom_call.1} parent=0
    _
  %s6 = ssub.s32 1, %s4
  %s7 = scalar_select 0, %s6, %s4
  $region1: #{tpu_custom_call.1} parent=0
    #allocation8 [shape = 'u8[32768]{0}', space=vmem, size = 0x8000, scoped, tag = 'input window, operand 0, single buffered']
    #allocation9 [shape = 's32[1]{0}', space=sflag, size = 0x4, scoped, tag = 'scoped memory for tpu_custom_call.1']
    #allocation10 [shape = 's32[1]{0}', space=sflag, size = 0x4, scoped, tag = 'scoped memory for tpu_custom_call.1']
    #allocation11 [shape = 'u8[4096]{0}', space=vmem, size = 0x1000, scoped, tag = 'input window, operand 1, single buffered']
    #allocation12 [shape = 's32[1]{0}', space=sflag, size = 0x4, scoped, tag = 'scoped memory for tpu_custom_call.1']
    #allocation13 [shape = 'u8[4096]{0}', space=vmem, size = 0x1000, scoped, tag = 'input window, operand 2, single buffered']
    #allocation14 [shape = 'u8[32768]{0}', space=vmem, size = 0x8000, scoped, tag = 'output window, operand 0, single buffered']
    %8 = vsyncpa [#allocation9], 0
    %9 = vsyncpa [#allocation12], 0
    %10 = vsyncpa [#allocation10], 0
    // Predicated region
    $region2: #{tpu_custom_call.1} parent=1 // pred_check
      _
    $region3: #{tpu_custom_call.1} parent=1 // pred_check_branch
      %12 = sbr.rel (0) target = $region5
    $region4: #{tpu_custom_call.1} parent=1 // pred_region
      %s14 = ssub.s32 1024, 1024
      %15 = vsyncadd [#allocation9], %s14
      %s16 = sshll.u32 [#allocation8], 4
      %s17 = int_to_ptr.vmem [resolvable:$true] %s16
      %22 = dma.hbm_to_vmem [thread:$0]  %s0, 1024, %s17, [#allocation9], 128, 128, 8
    $region5: #{tpu_custom_call.1} parent=1 // pred_fallthru
      _
    // Predicated region
    $region6: #{tpu_custom_call.1} parent=1 // pred_check
      _
    $region7: #{tpu_custom_call.1} parent=1 // pred_check_branch
      %24 = sbr.rel (0) target = $region9
    $region8: #{tpu_custom_call.1} parent=1 // pred_region
      %s26 = ssub.s32 128, 128
      %27 = vsyncadd [#allocation12], %s26
      %s29 = sshll.u32 [#allocation11], 4
      %s30 = int_to_ptr.vmem [resolvable:$true] %s29
      %32 = dma.hbm_to_vmem [thread:$0]  %s1, 128, %s30, [#allocation12]
    $region9: #{tpu_custom_call.1} parent=1 // pred_fallthru
      _
    // Predicated region
    $region10: #{tpu_custom_call.1} parent=1 // pred_check
      _
    $region11: #{tpu_custom_call.1} parent=1 // pred_check_branch
      %34 = sbr.rel (0) target = $region13
    $region12: #{tpu_custom_call.1} parent=1 // pred_region
      %s36 = ssub.s32 128, 128
      %37 = vsyncadd [#allocation12], %s36
      %s39 = sshll.u32 [#allocation13], 4
      %s40 = int_to_ptr.vmem [resolvable:$true] %s39
      %42 = dma.hbm_to_vmem [thread:$0]  %s2, 128, %s40, [#allocation12]
    $region13: #{tpu_custom_call.1} parent=1 // pred_fallthru
      _
    // Predicated region
    $region14: #{tpu_custom_call.1} parent=1 // pred_check
      _
    $region15: #{tpu_custom_call.1} parent=1 // pred_check_branch
      %44 = sbr.rel (0) target = $region17
    $region16: #{tpu_custom_call.1} parent=1 // pred_region
      %45 = dma.done [#allocation9], 1024
    $region17: #{tpu_custom_call.1} parent=1 // pred_fallthru
      _
    // Predicated region
    $region18: #{tpu_custom_call.1} parent=1 // pred_check
      _
    $region19: #{tpu_custom_call.1} parent=1 // pred_check_branch
      %47 = sbr.rel (0) target = $region21
    $region20: #{tpu_custom_call.1} parent=1 // pred_region
      %48 = dma.done [#allocation12], 128
    $region21: #{tpu_custom_call.1} parent=1 // pred_fallthru
      _
    // Predicated region
    $region22: #{tpu_custom_call.1} parent=1 // pred_check
      _
    $region23: #{tpu_custom_call.1} parent=1 // pred_check_branch
      %50 = sbr.rel (0) target = $region25
    $region24: #{tpu_custom_call.1} parent=1 // pred_region
      %51 = dma.done [#allocation12], 128
    $region25: #{tpu_custom_call.1} parent=1 // pred_fallthru
      _
    %p52 = scmp.eq.s32.totalorder 0, 0
    // Predicated region
    $region26: #{tpu_custom_call.1} parent=1 // pred_check
      %p53 = pneg %p52
    $region27: #{tpu_custom_call.1} parent=1 // pred_check_branch
      %55 = sbr.rel (%p53) target = $region29
    $region28: #{tpu_custom_call.1} parent=1 // pred_region
      %vm56 = vcmask 64512
      %57 = vst.msk [vmem:[#allocation2] sm:$0xff] %vm56, 0.0
      %58 = vst.msk [vmem:[#allocation3] sm:$0xff] %vm56, 0.0
      %vm59 = vcmask 80896
      %60 = vst.msk [vmem:[#allocation4] sm:$0xff] %vm59, 0.0
    $region29: #{tpu_custom_call.1} parent=1 // pred_fallthru
      _
    %v61 = vld [vmem:[#allocation2] sm:$0xff]
    %v62 = vld [vmem:[#allocation3] sm:$0xff]
    %v63 = vld [vmem:[#allocation8] sm:$0x1]
    %v64 = vld [vmem:[#allocation8 + $0x8] sm:$0x1]
    %v65 = vld [vmem:[#allocation8 + $0x10] sm:$0x1]
    %v66 = vld [vmem:[#allocation8 + $0x18] sm:$0x1]
    %v67 = vld [vmem:[#allocation8 + $0x20] sm:$0x1]
    %v68 = vld [vmem:[#allocation8 + $0x28] sm:$0x1]
    %v69 = vld [vmem:[#allocation8 + $0x30] sm:$0x1]
    %v70 = vld [vmem:[#allocation8 + $0x38] sm:$0x1]
    %v71 = vmul.f32 %v61, 0.9
    %v72 = vmax.f32 %v63, 0.0
    %v73 = vmax.f32 %v64, 0.0
    %v74 = vmax.f32 %v65, 0.0
    %v75 = vmax.f32 %v66, 0.0
    %v76 = vmax.f32 %v67, 0.0
    %v77 = vmax.f32 %v68, 0.0
    %v78 = vmax.f32 %v69, 0.0
    %v79 = vmax.f32 %v70, 0.0
    %v88 = vrot.slane %v73, 7
    %vm89 = vcmask 1041409
    %v90 = vsel %vm89, %v88, %v72
    %v91 = vrot.slane %v74, 6
    %vm92 = vcmask 1042434
    %v93 = vsel %vm92, %v91, %v90
    %v94 = vrot.slane %v75, 5
    %vm95 = vcmask 1043459
    %v96 = vsel %vm95, %v94, %v93
    %v97 = vrot.slane %v76, 4
    %vm98 = vcmask 1044484
    %v99 = vsel %vm98, %v97, %v96
    %v100 = vrot.slane %v77, 3
    %vm101 = vcmask 1045509
    %v102 = vsel %vm101, %v100, %v99
    %v103 = vrot.slane %v78, 2
    %vm104 = vcmask 1046534
    %v105 = vsel %vm104, %v103, %v102
    %v106 = vrot.slane %v79, 1
    %vm107 = vcmask 1047559
    %v108 = vsel %vm107, %v106, %v105
    %v110 = vadd.f32 %v71, %v108
    %v111 = vmul.f32 %v62, 0.9
    %v112 = vsub.f32 0.0, %v63
    %v113 = vsub.f32 0.0, %v64
    %v114 = vsub.f32 0.0, %v65
    %v115 = vsub.f32 0.0, %v66
    %v116 = vsub.f32 0.0, %v67
    %v117 = vsub.f32 0.0, %v68
    %v118 = vsub.f32 0.0, %v69
    %v119 = vsub.f32 0.0, %v70
    %v120 = vmax.f32 %v112, 0.0
    %v121 = vmax.f32 %v113, 0.0
    %v122 = vmax.f32 %v114, 0.0
    %v123 = vmax.f32 %v115, 0.0
    %v124 = vmax.f32 %v116, 0.0
    %v125 = vmax.f32 %v117, 0.0
    %v126 = vmax.f32 %v118, 0.0
    %v127 = vmax.f32 %v119, 0.0
    %v136 = vrot.slane %v121, 7
    %v137 = vsel %vm89, %v136, %v120
    %v138 = vrot.slane %v122, 6
    %v139 = vsel %vm92, %v138, %v137
    %v140 = vrot.slane %v123, 5
    %v141 = vsel %vm95, %v140, %v139
    %v142 = vrot.slane %v124, 4
    %v143 = vsel %vm98, %v142, %v141
    %v144 = vrot.slane %v125, 3
    %v145 = vsel %vm101, %v144, %v143
    %v146 = vrot.slane %v126, 2
    %v147 = vsel %vm104, %v146, %v145
    %v148 = vrot.slane %v127, 1
    %v149 = vsel %vm107, %v148, %v147
    %v151 = vadd.f32 %v111, %v149
    %vm152 = vcmp.ge.f32.partialorder %v110, 1.0
    %v153 = vsel %vm152, 1, 0
    %v154 = vcvt.s32.f32 %v153
    %vm155 = vcmp.ge.f32.partialorder %v151, 1.0
    %v156 = vsel %vm155, 1, 0
    %v157 = vcvt.s32.f32 %v156
    %v158 = vsub.f32 %v110, %v154
    %v159 = vsub.f32 %v151, %v157
    %vm160 = vcmask 64512
    %161 = vst.msk [vmem:[#allocation5] sm:$0xff] %vm160, %v154
    %162 = vst.msk [vmem:[#allocation6] sm:$0xff] %vm160, %v157
    %v163 = vld [vmem:[#allocation8 + $0x1] sm:$0x1]
    %v164 = vld [vmem:[#allocation8 + $0x9] sm:$0x1]
    %v165 = vld [vmem:[#allocation8 + $0x11] sm:$0x1]
    %v166 = vld [vmem:[#allocation8 + $0x19] sm:$0x1]
    %v167 = vld [vmem:[#allocation8 + $0x21] sm:$0x1]
    %v168 = vld [vmem:[#allocation8 + $0x29] sm:$0x1]
    %v169 = vld [vmem:[#allocation8 + $0x31] sm:$0x1]
    %v170 = vld [vmem:[#allocation8 + $0x39] sm:$0x1]
    %v171 = vmul.f32 %v158, 0.9
    %v172 = vmax.f32 %v163, 0.0
    %v173 = vmax.f32 %v164, 0.0
    %v174 = vmax.f32 %v165, 0.0
    %v175 = vmax.f32 %v166, 0.0
    %v176 = vmax.f32 %v167, 0.0
    %v177 = vmax.f32 %v168, 0.0
    %v178 = vmax.f32 %v169, 0.0
    %v179 = vmax.f32 %v170, 0.0
    %v188 = vrot.slane %v173, 7
    %v189 = vsel %vm89, %v188, %v172
    %v190 = vrot.slane %v174, 6
    %v191 = vsel %vm92, %v190, %v189
    %v192 = vrot.slane %v175, 5
    %v193 = vsel %vm95, %v192, %v191
    %v194 = vrot.slane %v176, 4
    %v195 = vsel %vm98, %v194, %v193
    %v196 = vrot.slane %v177, 3
    %v197 = vsel %vm101, %v196, %v195
    %v198 = vrot.slane %v178, 2
    %v199 = vsel %vm104, %v198, %v197
    %v200 = vrot.slane %v179, 1
    %v201 = vsel %vm107, %v200, %v199
    %v203 = vadd.f32 %v171, %v201
    %v204 = vmul.f32 %v159, 0.9
    %v205 = vsub.f32 0.0, %v163
    %v206 = vsub.f32 0.0, %v164
    %v207 = vsub.f32 0.0, %v165
    %v208 = vsub.f32 0.0, %v166
    %v209 = vsub.f32 0.0, %v167
    %v210 = vsub.f32 0.0, %v168
    %v211 = vsub.f32 0.0, %v169
    %v212 = vsub.f32 0.0, %v170
    %v213 = vmax.f32 %v205, 0.0
    %v214 = vmax.f32 %v206, 0.0
    %v215 = vmax.f32 %v207, 0.0
    %v216 = vmax.f32 %v208, 0.0
    %v217 = vmax.f32 %v209, 0.0
    %v218 = vmax.f32 %v210, 0.0
    %v219 = vmax.f32 %v211, 0.0
    %v220 = vmax.f32 %v212, 0.0
    %v229 = vrot.slane %v214, 7
    %v230 = vsel %vm89, %v229, %v213
    %v231 = vrot.slane %v215, 6
    %v232 = vsel %vm92, %v231, %v230
    %v233 = vrot.slane %v216, 5
    %v234 = vsel %vm95, %v233, %v232
    %v235 = vrot.slane %v217, 4
    %v236 = vsel %vm98, %v235, %v234
    %v237 = vrot.slane %v218, 3
    %v238 = vsel %vm101, %v237, %v236
    %v239 = vrot.slane %v219, 2
    %v240 = vsel %vm104, %v239, %v238
    %v241 = vrot.slane %v220, 1
    %v242 = vsel %vm107, %v241, %v240
    %v244 = vadd.f32 %v204, %v242
    %vm245 = vcmp.ge.f32.partialorder %v203, 1.0
    %v246 = vsel %vm245, 1, 0
    %v247 = vcvt.s32.f32 %v246
    %vm248 = vcmp.ge.f32.partialorder %v244, 1.0
    %v249 = vsel %vm248, 1, 0
    %v250 = vcvt.s32.f32 %v249
    %v251 = vsub.f32 %v203, %v247
    %v252 = vsub.f32 %v244, %v250
    %253 = vst.msk [vmem:[#allocation5 + $0x8] sm:$0xff] %vm160, %v247
    %254 = vst.msk [vmem:[#allocation6 + $0x8] sm:$0xff] %vm160, %v250
    %v255 = vld [vmem:[#allocation8 + $0x2] sm:$0x1]
    %v256 = vld [vmem:[#allocation8 + $0xa] sm:$0x1]
    %v257 = vld [vmem:[#allocation8 + $0x12] sm:$0x1]
    %v258 = vld [vmem:[#allocation8 + $0x1a] sm:$0x1]
    %v259 = vld [vmem:[#allocation8 + $0x22] sm:$0x1]
    %v260 = vld [vmem:[#allocation8 + $0x2a] sm:$0x1]
    %v261 = vld [vmem:[#allocation8 + $0x32] sm:$0x1]
    %v262 = vld [vmem:[#allocation8 + $0x3a] sm:$0x1]
    %v263 = vmul.f32 %v251, 0.9
    %v264 = vmax.f32 %v255, 0.0
    %v265 = vmax.f32 %v256, 0.0
    %v266 = vmax.f32 %v257, 0.0
    %v267 = vmax.f32 %v258, 0.0
    %v268 = vmax.f32 %v259, 0.0
    %v269 = vmax.f32 %v260, 0.0
    %v270 = vmax.f32 %v261, 0.0
    %v271 = vmax.f32 %v262, 0.0
    %v280 = vrot.slane %v265, 7
    %v281 = vsel %vm89, %v280, %v264
    %v282 = vrot.slane %v266, 6
    %v283 = vsel %vm92, %v282, %v281
    %v284 = vrot.slane %v267, 5
    %v285 = vsel %vm95, %v284, %v283
    %v286 = vrot.slane %v268, 4
    %v287 = vsel %vm98, %v286, %v285
    %v288 = vrot.slane %v269, 3
    %v289 = vsel %vm101, %v288, %v287
    %v290 = vrot.slane %v270, 2
    %v291 = vsel %vm104, %v290, %v289
    %v292 = vrot.slane %v271, 1
    %v293 = vsel %vm107, %v292, %v291
    %v295 = vadd.f32 %v263, %v293
    %v296 = vmul.f32 %v252, 0.9
    %v297 = vsub.f32 0.0, %v255
    %v298 = vsub.f32 0.0, %v256
    %v299 = vsub.f32 0.0, %v257
    %v300 = vsub.f32 0.0, %v258
    %v301 = vsub.f32 0.0, %v259
    %v302 = vsub.f32 0.0, %v260
    %v303 = vsub.f32 0.0, %v261
    %v304 = vsub.f32 0.0, %v262
    %v305 = vmax.f32 %v297, 0.0
    %v306 = vmax.f32 %v298, 0.0
    %v307 = vmax.f32 %v299, 0.0
    %v308 = vmax.f32 %v300, 0.0
    %v309 = vmax.f32 %v301, 0.0
    %v310 = vmax.f32 %v302, 0.0
    %v311 = vmax.f32 %v303, 0.0
    %v312 = vmax.f32 %v304, 0.0
    %v321 = vrot.slane %v306, 7
    %v322 = vsel %vm89, %v321, %v305
    %v323 = vrot.slane %v307, 6
    %v324 = vsel %vm92, %v323, %v322
    %v325 = vrot.slane %v308, 5
    %v326 = vsel %vm95, %v325, %v324
    %v327 = vrot.slane %v309, 4
    %v328 = vsel %vm98, %v327, %v326
    %v329 = vrot.slane %v310, 3
    %v330 = vsel %vm101, %v329, %v328
    %v331 = vrot.slane %v311, 2
    %v332 = vsel %vm104, %v331, %v330
    %v333 = vrot.slane %v312, 1
    %v334 = vsel %vm107, %v333, %v332
    %v336 = vadd.f32 %v296, %v334
    %vm337 = vcmp.ge.f32.partialorder %v295, 1.0
    %v338 = vsel %vm337, 1, 0
    %v339 = vcvt.s32.f32 %v338
    %vm340 = vcmp.ge.f32.partialorder %v336, 1.0
    %v341 = vsel %vm340, 1, 0
    %v342 = vcvt.s32.f32 %v341
    %v343 = vsub.f32 %v295, %v339
    %v344 = vsub.f32 %v336, %v342
    %345 = vst.msk [vmem:[#allocation5 + $0x10] sm:$0xff] %vm160, %v339
    %346 = vst.msk [vmem:[#allocation6 + $0x10] sm:$0xff] %vm160, %v342
    %v347 = vld [vmem:[#allocation8 + $0x3] sm:$0x1]
    %v348 = vld [vmem:[#allocation8 + $0xb] sm:$0x1]
    %v349 = vld [vmem:[#allocation8 + $0x13] sm:$0x1]
    %v350 = vld [vmem:[#allocation8 + $0x1b] sm:$0x1]
    %v351 = vld [vmem:[#allocation8 + $0x23] sm:$0x1]
    %v352 = vld [vmem:[#allocation8 + $0x2b] sm:$0x1]
    %v353 = vld [vmem:[#allocation8 + $0x33] sm:$0x1]
    %v354 = vld [vmem:[#allocation8 + $0x3b] sm:$0x1]
    %v355 = vmul.f32 %v343, 0.9
    %v356 = vmax.f32 %v347, 0.0
    %v357 = vmax.f32 %v348, 0.0
    %v358 = vmax.f32 %v349, 0.0
    %v359 = vmax.f32 %v350, 0.0
    %v360 = vmax.f32 %v351, 0.0
    %v361 = vmax.f32 %v352, 0.0
    %v362 = vmax.f32 %v353, 0.0
    %v363 = vmax.f32 %v354, 0.0
    %v372 = vrot.slane %v357, 7
    %v373 = vsel %vm89, %v372, %v356
    %v374 = vrot.slane %v358, 6
    %v375 = vsel %vm92, %v374, %v373
    %v376 = vrot.slane %v359, 5
    %v377 = vsel %vm95, %v376, %v375
    %v378 = vrot.slane %v360, 4
    %v379 = vsel %vm98, %v378, %v377
    %v380 = vrot.slane %v361, 3
    %v381 = vsel %vm101, %v380, %v379
    %v382 = vrot.slane %v362, 2
    %v383 = vsel %vm104, %v382, %v381
    %v384 = vrot.slane %v363, 1
    %v385 = vsel %vm107, %v384, %v383
    %v387 = vadd.f32 %v355, %v385
    %v388 = vmul.f32 %v344, 0.9
    %v389 = vsub.f32 0.0, %v347
    %v390 = vsub.f32 0.0, %v348
    %v391 = vsub.f32 0.0, %v349
    %v392 = vsub.f32 0.0, %v350
    %v393 = vsub.f32 0.0, %v351
    %v394 = vsub.f32 0.0, %v352
    %v395 = vsub.f32 0.0, %v353
    %v396 = vsub.f32 0.0, %v354
    %v397 = vmax.f32 %v389, 0.0
    %v398 = vmax.f32 %v390, 0.0
    %v399 = vmax.f32 %v391, 0.0
    %v400 = vmax.f32 %v392, 0.0
    %v401 = vmax.f32 %v393, 0.0
    %v402 = vmax.f32 %v394, 0.0
    %v403 = vmax.f32 %v395, 0.0
    %v404 = vmax.f32 %v396, 0.0
    %v413 = vrot.slane %v398, 7
    %v414 = vsel %vm89, %v413, %v397
    %v415 = vrot.slane %v399, 6
    %v416 = vsel %vm92, %v415, %v414
    %v417 = vrot.slane %v400, 5
    %v418 = vsel %vm95, %v417, %v416
    %v419 = vrot.slane %v401, 4
    %v420 = vsel %vm98, %v419, %v418
    %v421 = vrot.slane %v402, 3
    %v422 = vsel %vm101, %v421, %v420
    %v423 = vrot.slane %v403, 2
    %v424 = vsel %vm104, %v423, %v422
    %v425 = vrot.slane %v404, 1
    %v426 = vsel %vm107, %v425, %v424
    %v428 = vadd.f32 %v388, %v426
    %vm429 = vcmp.ge.f32.partialorder %v387, 1.0
    %v430 = vsel %vm429, 1, 0
    %v431 = vcvt.s32.f32 %v430
    %vm432 = vcmp.ge.f32.partialorder %v428, 1.0
    %v433 = vsel %vm432, 1, 0
    %v434 = vcvt.s32.f32 %v433
    %v435 = vsub.f32 %v387, %v431
    %v436 = vsub.f32 %v428, %v434
    %437 = vst.msk [vmem:[#allocation5 + $0x18] sm:$0xff] %vm160, %v431
    %438 = vst.msk [vmem:[#allocation6 + $0x18] sm:$0xff] %vm160, %v434
    %v439 = vld [vmem:[#allocation8 + $0x4] sm:$0x1]
    %v440 = vld [vmem:[#allocation8 + $0xc] sm:$0x1]
    %v441 = vld [vmem:[#allocation8 + $0x14] sm:$0x1]
    %v442 = vld [vmem:[#allocation8 + $0x1c] sm:$0x1]
    %v443 = vld [vmem:[#allocation8 + $0x24] sm:$0x1]
    %v444 = vld [vmem:[#allocation8 + $0x2c] sm:$0x1]
    %v445 = vld [vmem:[#allocation8 + $0x34] sm:$0x1]
    %v446 = vld [vmem:[#allocation8 + $0x3c] sm:$0x1]
    %v447 = vmul.f32 %v435, 0.9
    %v448 = vmax.f32 %v439, 0.0
    %v449 = vmax.f32 %v440, 0.0
    %v450 = vmax.f32 %v441, 0.0
    %v451 = vmax.f32 %v442, 0.0
    %v452 = vmax.f32 %v443, 0.0
    %v453 = vmax.f32 %v444, 0.0
    %v454 = vmax.f32 %v445, 0.0
    %v455 = vmax.f32 %v446, 0.0
    %v464 = vrot.slane %v449, 7
    %v465 = vsel %vm89, %v464, %v448
    %v466 = vrot.slane %v450, 6
    %v467 = vsel %vm92, %v466, %v465
    %v468 = vrot.slane %v451, 5
    %v469 = vsel %vm95, %v468, %v467
    %v470 = vrot.slane %v452, 4
    %v471 = vsel %vm98, %v470, %v469
    %v472 = vrot.slane %v453, 3
    %v473 = vsel %vm101, %v472, %v471
    %v474 = vrot.slane %v454, 2
    %v475 = vsel %vm104, %v474, %v473
    %v476 = vrot.slane %v455, 1
    %v477 = vsel %vm107, %v476, %v475
    %v479 = vadd.f32 %v447, %v477
    %v480 = vmul.f32 %v436, 0.9
    %v481 = vsub.f32 0.0, %v439
    %v482 = vsub.f32 0.0, %v440
    %v483 = vsub.f32 0.0, %v441
    %v484 = vsub.f32 0.0, %v442
    %v485 = vsub.f32 0.0, %v443
    %v486 = vsub.f32 0.0, %v444
    %v487 = vsub.f32 0.0, %v445
    %v488 = vsub.f32 0.0, %v446
    %v489 = vmax.f32 %v481, 0.0
    %v490 = vmax.f32 %v482, 0.0
    %v491 = vmax.f32 %v483, 0.0
    %v492 = vmax.f32 %v484, 0.0
    %v493 = vmax.f32 %v485, 0.0
    %v494 = vmax.f32 %v486, 0.0
    %v495 = vmax.f32 %v487, 0.0
    %v496 = vmax.f32 %v488, 0.0
    %v505 = vrot.slane %v490, 7
    %v506 = vsel %vm89, %v505, %v489
    %v507 = vrot.slane %v491, 6
    %v508 = vsel %vm92, %v507, %v506
    %v509 = vrot.slane %v492, 5
    %v510 = vsel %vm95, %v509, %v508
    %v511 = vrot.slane %v493, 4
    %v512 = vsel %vm98, %v511, %v510
    %v513 = vrot.slane %v494, 3
    %v514 = vsel %vm101, %v513, %v512
    %v515 = vrot.slane %v495, 2
    %v516 = vsel %vm104, %v515, %v514
    %v517 = vrot.slane %v496, 1
    %v518 = vsel %vm107, %v517, %v516
    %v520 = vadd.f32 %v480, %v518
    %vm521 = vcmp.ge.f32.partialorder %v479, 1.0
    %v522 = vsel %vm521, 1, 0
    %v523 = vcvt.s32.f32 %v522
    %vm524 = vcmp.ge.f32.partialorder %v520, 1.0
    %v525 = vsel %vm524, 1, 0
    %v526 = vcvt.s32.f32 %v525
    %v527 = vsub.f32 %v479, %v523
    %v528 = vsub.f32 %v520, %v526
    %529 = vst.msk [vmem:[#allocation5 + $0x20] sm:$0xff] %vm160, %v523
    %530 = vst.msk [vmem:[#allocation6 + $0x20] sm:$0xff] %vm160, %v526
    %v531 = vld [vmem:[#allocation8 + $0x5] sm:$0x1]
    %v532 = vld [vmem:[#allocation8 + $0xd] sm:$0x1]
    %v533 = vld [vmem:[#allocation8 + $0x15] sm:$0x1]
    %v534 = vld [vmem:[#allocation8 + $0x1d] sm:$0x1]
    %v535 = vld [vmem:[#allocation8 + $0x25] sm:$0x1]
    %v536 = vld [vmem:[#allocation8 + $0x2d] sm:$0x1]
    %v537 = vld [vmem:[#allocation8 + $0x35] sm:$0x1]
    %v538 = vld [vmem:[#allocation8 + $0x3d] sm:$0x1]
    %v539 = vmul.f32 %v527, 0.9
    %v540 = vmax.f32 %v531, 0.0
    %v541 = vmax.f32 %v532, 0.0
    %v542 = vmax.f32 %v533, 0.0
    %v543 = vmax.f32 %v534, 0.0
    %v544 = vmax.f32 %v535, 0.0
    %v545 = vmax.f32 %v536, 0.0
    %v546 = vmax.f32 %v537, 0.0
    %v547 = vmax.f32 %v538, 0.0
    %v556 = vrot.slane %v541, 7
    %v557 = vsel %vm89, %v556, %v540
    %v558 = vrot.slane %v542, 6
    %v559 = vsel %vm92, %v558, %v557
    %v560 = vrot.slane %v543, 5
    %v561 = vsel %vm95, %v560, %v559
    %v562 = vrot.slane %v544, 4
    %v563 = vsel %vm98, %v562, %v561
    %v564 = vrot.slane %v545, 3
    %v565 = vsel %vm101, %v564, %v563
    %v566 = vrot.slane %v546, 2
    %v567 = vsel %vm104, %v566, %v565
    %v568 = vrot.slane %v547, 1
    %v569 = vsel %vm107, %v568, %v567
    %v571 = vadd.f32 %v539, %v569
    %v572 = vmul.f32 %v528, 0.9
    %v573 = vsub.f32 0.0, %v531
    %v574 = vsub.f32 0.0, %v532
    %v575 = vsub.f32 0.0, %v533
    %v576 = vsub.f32 0.0, %v534
    %v577 = vsub.f32 0.0, %v535
    %v578 = vsub.f32 0.0, %v536
    %v579 = vsub.f32 0.0, %v537
    %v580 = vsub.f32 0.0, %v538
    %v581 = vmax.f32 %v573, 0.0
    %v582 = vmax.f32 %v574, 0.0
    %v583 = vmax.f32 %v575, 0.0
    %v584 = vmax.f32 %v576, 0.0
    %v585 = vmax.f32 %v577, 0.0
    %v586 = vmax.f32 %v578, 0.0
    %v587 = vmax.f32 %v579, 0.0
    %v588 = vmax.f32 %v580, 0.0
    %v597 = vrot.slane %v582, 7
    %v598 = vsel %vm89, %v597, %v581
    %v599 = vrot.slane %v583, 6
    %v600 = vsel %vm92, %v599, %v598
    %v601 = vrot.slane %v584, 5
    %v602 = vsel %vm95, %v601, %v600
    %v603 = vrot.slane %v585, 4
    %v604 = vsel %vm98, %v603, %v602
    %v605 = vrot.slane %v586, 3
    %v606 = vsel %vm101, %v605, %v604
    %v607 = vrot.slane %v587, 2
    %v608 = vsel %vm104, %v607, %v606
    %v609 = vrot.slane %v588, 1
    %v610 = vsel %vm107, %v609, %v608
    %v612 = vadd.f32 %v572, %v610
    %vm613 = vcmp.ge.f32.partialorder %v571, 1.0
    %v614 = vsel %vm613, 1, 0
    %v615 = vcvt.s32.f32 %v614
    %vm616 = vcmp.ge.f32.partialorder %v612, 1.0
    %v617 = vsel %vm616, 1, 0
    %v618 = vcvt.s32.f32 %v617
    %v619 = vsub.f32 %v571, %v615
    %v620 = vsub.f32 %v612, %v618
    %621 = vst.msk [vmem:[#allocation5 + $0x28] sm:$0xff] %vm160, %v615
    %622 = vst.msk [vmem:[#allocation6 + $0x28] sm:$0xff] %vm160, %v618
    %v623 = vld [vmem:[#allocation8 + $0x6] sm:$0x1]
    %v624 = vld [vmem:[#allocation8 + $0xe] sm:$0x1]
    %v625 = vld [vmem:[#allocation8 + $0x16] sm:$0x1]
    %v626 = vld [vmem:[#allocation8 + $0x1e] sm:$0x1]
    %v627 = vld [vmem:[#allocation8 + $0x26] sm:$0x1]
    %v628 = vld [vmem:[#allocation8 + $0x2e] sm:$0x1]
    %v629 = vld [vmem:[#allocation8 + $0x36] sm:$0x1]
    %v630 = vld [vmem:[#allocation8 + $0x3e] sm:$0x1]
    %v631 = vmul.f32 %v619, 0.9
    %v632 = vmax.f32 %v623, 0.0
    %v633 = vmax.f32 %v624, 0.0
    %v634 = vmax.f32 %v625, 0.0
    %v635 = vmax.f32 %v626, 0.0
    %v636 = vmax.f32 %v627, 0.0
    %v637 = vmax.f32 %v628, 0.0
    %v638 = vmax.f32 %v629, 0.0
    %v639 = vmax.f32 %v630, 0.0
    %v648 = vrot.slane %v633, 7
    %v649 = vsel %vm89, %v648, %v632
    %v650 = vrot.slane %v634, 6
    %v651 = vsel %vm92, %v650, %v649
    %v652 = vrot.slane %v635, 5
    %v653 = vsel %vm95, %v652, %v651
    %v654 = vrot.slane %v636, 4
    %v655 = vsel %vm98, %v654, %v653
    %v656 = vrot.slane %v637, 3
    %v657 = vsel %vm101, %v656, %v655
    %v658 = vrot.slane %v638, 2
    %v659 = vsel %vm104, %v658, %v657
    %v660 = vrot.slane %v639, 1
    %v661 = vsel %vm107, %v660, %v659
    %v663 = vadd.f32 %v631, %v661
    %v664 = vmul.f32 %v620, 0.9
    %v665 = vsub.f32 0.0, %v623
    %v666 = vsub.f32 0.0, %v624
    %v667 = vsub.f32 0.0, %v625
    %v668 = vsub.f32 0.0, %v626
    %v669 = vsub.f32 0.0, %v627
    %v670 = vsub.f32 0.0, %v628
    %v671 = vsub.f32 0.0, %v629
    %v672 = vsub.f32 0.0, %v630
    %v673 = vmax.f32 %v665, 0.0
    %v674 = vmax.f32 %v666, 0.0
    %v675 = vmax.f32 %v667, 0.0
    %v676 = vmax.f32 %v668, 0.0
    %v677 = vmax.f32 %v669, 0.0
    %v678 = vmax.f32 %v670, 0.0
    %v679 = vmax.f32 %v671, 0.0
    %v680 = vmax.f32 %v672, 0.0
    %v689 = vrot.slane %v674, 7
    %v690 = vsel %vm89, %v689, %v673
    %v691 = vrot.slane %v675, 6
    %v692 = vsel %vm92, %v691, %v690
    %v693 = vrot.slane %v676, 5
    %v694 = vsel %vm95, %v693, %v692
    %v695 = vrot.slane %v677, 4
    %v696 = vsel %vm98, %v695, %v694
    %v697 = vrot.slane %v678, 3
    %v698 = vsel %vm101, %v697, %v696
    %v699 = vrot.slane %v679, 2
    %v700 = vsel %vm104, %v699, %v698
    %v701 = vrot.slane %v680, 1
    %v702 = vsel %vm107, %v701, %v700
    %v704 = vadd.f32 %v664, %v702
    %vm705 = vcmp.ge.f32.partialorder %v663, 1.0
    %v706 = vsel %vm705, 1, 0
    %v707 = vcvt.s32.f32 %v706
    %vm708 = vcmp.ge.f32.partialorder %v704, 1.0
    %v709 = vsel %vm708, 1, 0
    %v710 = vcvt.s32.f32 %v709
    %v711 = vsub.f32 %v663, %v707
    %v712 = vsub.f32 %v704, %v710
    %713 = vst.msk [vmem:[#allocation5 + $0x30] sm:$0xff] %vm160, %v707
    %714 = vst.msk [vmem:[#allocation6 + $0x30] sm:$0xff] %vm160, %v710
    %v715 = vld [vmem:[#allocation8 + $0x7] sm:$0x1]
    %v716 = vld [vmem:[#allocation8 + $0xf] sm:$0x1]
    %v717 = vld [vmem:[#allocation8 + $0x17] sm:$0x1]
    %v718 = vld [vmem:[#allocation8 + $0x1f] sm:$0x1]
    %v719 = vld [vmem:[#allocation8 + $0x27] sm:$0x1]
    %v720 = vld [vmem:[#allocation8 + $0x2f] sm:$0x1]
    %v721 = vld [vmem:[#allocation8 + $0x37] sm:$0x1]
    %v722 = vld [vmem:[#allocation8 + $0x3f] sm:$0x1]
    %v723 = vmul.f32 %v711, 0.9
    %v724 = vmax.f32 %v715, 0.0
    %v725 = vmax.f32 %v716, 0.0
    %v726 = vmax.f32 %v717, 0.0
    %v727 = vmax.f32 %v718, 0.0
    %v728 = vmax.f32 %v719, 0.0
    %v729 = vmax.f32 %v720, 0.0
    %v730 = vmax.f32 %v721, 0.0
    %v731 = vmax.f32 %v722, 0.0
    %v740 = vrot.slane %v725, 7
    %v741 = vsel %vm89, %v740, %v724
    %v742 = vrot.slane %v726, 6
    %v743 = vsel %vm92, %v742, %v741
    %v744 = vrot.slane %v727, 5
    %v745 = vsel %vm95, %v744, %v743
    %v746 = vrot.slane %v728, 4
    %v747 = vsel %vm98, %v746, %v745
    %v748 = vrot.slane %v729, 3
    %v749 = vsel %vm101, %v748, %v747
    %v750 = vrot.slane %v730, 2
    %v751 = vsel %vm104, %v750, %v749
    %v752 = vrot.slane %v731, 1
    %v753 = vsel %vm107, %v752, %v751
    %v755 = vadd.f32 %v723, %v753
    %v756 = vmul.f32 %v712, 0.9
    %v757 = vsub.f32 0.0, %v715
    %v758 = vsub.f32 0.0, %v716
    %v759 = vsub.f32 0.0, %v717
    %v760 = vsub.f32 0.0, %v718
    %v761 = vsub.f32 0.0, %v719
    %v762 = vsub.f32 0.0, %v720
    %v763 = vsub.f32 0.0, %v721
    %v764 = vsub.f32 0.0, %v722
    %v765 = vmax.f32 %v757, 0.0
    %v766 = vmax.f32 %v758, 0.0
    %v767 = vmax.f32 %v759, 0.0
    %v768 = vmax.f32 %v760, 0.0
    %v769 = vmax.f32 %v761, 0.0
    %v770 = vmax.f32 %v762, 0.0
    %v771 = vmax.f32 %v763, 0.0
    %v772 = vmax.f32 %v764, 0.0
    %v781 = vrot.slane %v766, 7
    %v782 = vsel %vm89, %v781, %v765
    %v783 = vrot.slane %v767, 6
    %v784 = vsel %vm92, %v783, %v782
    %v785 = vrot.slane %v768, 5
    %v786 = vsel %vm95, %v785, %v784
    %v787 = vrot.slane %v769, 4
    %v788 = vsel %vm98, %v787, %v786
    %v789 = vrot.slane %v770, 3
    %v790 = vsel %vm101, %v789, %v788
    %v791 = vrot.slane %v771, 2
    %v792 = vsel %vm104, %v791, %v790
    %v793 = vrot.slane %v772, 1
    %v794 = vsel %vm107, %v793, %v792
    %v796 = vadd.f32 %v756, %v794
    %vm797 = vcmp.ge.f32.partialorder %v755, 1.0
    %v798 = vsel %vm797, 1, 0
    %v799 = vcvt.s32.f32 %v798
    %vm800 = vcmp.ge.f32.partialorder %v796, 1.0
    %v801 = vsel %vm800, 1, 0
    %v802 = vcvt.s32.f32 %v801
    %v803 = vsub.f32 %v755, %v799
    %v804 = vsub.f32 %v796, %v802
    %805 = vst.msk [vmem:[#allocation5 + $0x38] sm:$0xff] %vm160, %v799
    %806 = vst.msk [vmem:[#allocation6 + $0x38] sm:$0xff] %vm160, %v802
    %807 = vst.msk [vmem:[#allocation2] sm:$0xff] %vm160, %v803
    %808 = vst.msk [vmem:[#allocation3] sm:$0xff] %vm160, %v804
    %v809 = vld [vmem:[#allocation5] sm:$0xff]
    %v810 = vld [vmem:[#allocation5 + $0x8] sm:$0xff]
    %v811 = vld [vmem:[#allocation5 + $0x10] sm:$0xff]
    %v812 = vld [vmem:[#allocation5 + $0x18] sm:$0xff]
    %v813 = vld [vmem:[#allocation5 + $0x20] sm:$0xff]
    %v814 = vld [vmem:[#allocation5 + $0x28] sm:$0xff]
    %v815 = vld [vmem:[#allocation5 + $0x30] sm:$0xff]
    %v816 = vld [vmem:[#allocation5 + $0x38] sm:$0xff]
    %v817 = vld [vmem:[#allocation6] sm:$0xff]
    %v818 = vld [vmem:[#allocation6 + $0x8] sm:$0xff]
    %v819 = vld [vmem:[#allocation6 + $0x10] sm:$0xff]
    %v820 = vld [vmem:[#allocation6 + $0x18] sm:$0xff]
    %v821 = vld [vmem:[#allocation6 + $0x20] sm:$0xff]
    %v822 = vld [vmem:[#allocation6 + $0x28] sm:$0xff]
    %v823 = vld [vmem:[#allocation6 + $0x30] sm:$0xff]
    %v824 = vld [vmem:[#allocation6 + $0x38] sm:$0xff]
    %v825 = vld [vmem:[#allocation11] sm:$0xff]
    %v826 = vld [vmem:[#allocation13] sm:$0xff]
    %v828 = vsel %vm160, %v817, 0
    %v831 = vsel %vm160, %v818, 0
    %v834 = vsel %vm160, %v819, 0
    %v837 = vsel %vm160, %v820, 0
    %v840 = vsel %vm160, %v821, 0
    %v843 = vsel %vm160, %v822, 0
    %v846 = vsel %vm160, %v823, 0
    %v849 = vsel %vm160, %v824, 0
    %851 = vmatprep.subr.mxu0 0.0
    %852 = vmatpush1.msra.mxu0 %v826
    %853 = vmatprep.subr.mxu0 0.0
    %854 = vmatpush1.msra.mxu0 0.0
    %855 = vmatprep.subr.mxu0 0.0
    %856 = vmatpush1.msra.mxu0 0.0
    %857 = vmatprep.subr.mxu0 0.0
    %858 = vmatpush1.msra.mxu0 0.0
    %859 = vmatprep.subr.mxu0 0.0
    %860 = vmatpush1.msra.mxu0 0.0
    %861 = vmatprep.subr.mxu0 0.0
    %862 = vmatpush1.msra.mxu0 0.0
    %863 = vmatprep.subr.mxu0 0.0
    %864 = vmatpush1.msra.mxu0 0.0
    %865 = vmatprep.subr.mxu0 0.0
    %866 = vmatpush1.msra.mxu0 0.0
    %867 = vmatprep.subr.mxu0 0.0
    %868 = vmatpush1.msra.mxu0 0.0
    %869 = vmatprep.subr.mxu0 0.0
    %870 = vmatpush1.msra.mxu0 0.0
    %871 = vmatprep.subr.mxu0 0.0
    %872 = vmatpush1.msra.mxu0 0.0
    %873 = vmatprep.subr.mxu0 0.0
    %874 = vmatpush1.msra.mxu0 0.0
    %875 = vmatprep.subr.mxu0 0.0
    %876 = vmatpush1.msra.mxu0 0.0
    %877 = vmatprep.subr.mxu0 0.0
    %878 = vmatpush1.msra.mxu0 0.0
    %879 = vmatprep.subr.mxu0 0.0
    %880 = vmatpush1.msra.mxu0 0.0
    %881 = vmatprep.subr.mxu0 0.0
    %882 = vmatpush1.msra.mxu0 0.0
    %883 = vmatprep.subr.mxu0 0.0
    %884 = vmatpush1.msra.mxu0 0.0
    %885 = vmatprep.subr.mxu0 0.0
    %886 = vmatpush1.msra.mxu0 0.0
    %887 = vmatprep.subr.mxu0 0.0
    %888 = vmatpush1.msra.mxu0 0.0
    %889 = vmatprep.subr.mxu0 0.0
    %890 = vmatpush1.msra.mxu0 0.0
    %891 = vmatprep.subr.mxu0 0.0
    %892 = vmatpush1.msra.mxu0 0.0
    %893 = vmatprep.subr.mxu0 0.0
    %894 = vmatpush1.msra.mxu0 0.0
    %895 = vmatprep.subr.mxu0 0.0
    %896 = vmatpush1.msra.mxu0 0.0
    %897 = vmatprep.subr.mxu0 0.0
    %898 = vmatpush1.msra.mxu0 0.0
    %899 = vmatprep.subr.mxu0 0.0
    %900 = vmatpush1.msra.mxu0 0.0
    %901 = vmatprep.subr.mxu0 0.0
    %902 = vmatpush1.msra.mxu0 0.0
    %903 = vmatprep.subr.mxu0 0.0
    %904 = vmatpush1.msra.mxu0 0.0
    %905 = vmatprep.subr.mxu0 0.0
    %906 = vmatpush1.msra.mxu0 0.0
    %907 = vmatprep.subr.mxu0 0.0
    %908 = vmatpush1.msra.mxu0 0.0
    %909 = vmatprep.subr.mxu0 0.0
    %910 = vmatpush1.msra.mxu0 0.0
    %911 = vmatprep.subr.mxu0 0.0
    %912 = vmatpush1.msra.mxu0 0.0
    %913 = vmatprep.subr.mxu0 0.0
    %914 = vmatpush1.msra.mxu0 0.0
    %915 = vmatprep.mubr.f32.mxu0 0.0
    %916 = vmatmul.mubr.f32.gmra.mrb[0].mxu0 %v828
    %v917 = vpop.f32.mrb[0].mxu0
    %v918 = vadd.f32 0.0, %v917
    %v919 = vpop.f32.mrb[0].mxu0
    %920 = vmatprep.mubr.f32.mxu0 0.0
    %921 = vmatmul.mubr.f32.gmra.mrb[0].mxu0 %v831
    %v922 = vpop.f32.mrb[0].mxu0
    %v923 = vadd.f32 0.0, %v922
    %v924 = vpop.f32.mrb[0].mxu0
    %925 = vmatprep.mubr.f32.mxu0 0.0
    %926 = vmatmul.mubr.f32.gmra.mrb[0].mxu0 %v834
    %v927 = vpop.f32.mrb[0].mxu0
    %v928 = vadd.f32 0.0, %v927
    %v929 = vpop.f32.mrb[0].mxu0
    %930 = vmatprep.mubr.f32.mxu0 0.0
    %931 = vmatmul.mubr.f32.gmra.mrb[0].mxu0 %v837
    %v932 = vpop.f32.mrb[0].mxu0
    %v933 = vadd.f32 0.0, %v932
    %v934 = vpop.f32.mrb[0].mxu0
    %935 = vmatprep.mubr.f32.mxu0 0.0
    %936 = vmatmul.mubr.f32.gmra.mrb[0].mxu0 %v840
    %v937 = vpop.f32.mrb[0].mxu0
    %v938 = vadd.f32 0.0, %v937
    %v939 = vpop.f32.mrb[0].mxu0
    %940 = vmatprep.mubr.f32.mxu0 0.0
    %941 = vmatmul.mubr.f32.gmra.mrb[0].mxu0 %v843
    %v942 = vpop.f32.mrb[0].mxu0
    %v943 = vadd.f32 0.0, %v942
    %v944 = vpop.f32.mrb[0].mxu0
    %945 = vmatprep.mubr.f32.mxu0 0.0
    %946 = vmatmul.mubr.f32.gmra.mrb[0].mxu0 %v846
    %v947 = vpop.f32.mrb[0].mxu0
    %v948 = vadd.f32 0.0, %v947
    %v949 = vpop.f32.mrb[0].mxu0
    %950 = vmatprep.mubr.f32.mxu0 0.0
    %951 = vmatmul.mubr.f32.gmra.mrb[0].mxu0 %v849
    %v952 = vpop.f32.mrb[0].mxu0
    %v953 = vadd.f32 0.0, %v952
    %v954 = vpop.f32.mrb[0].mxu0
    %955 = vdwg.mxu0
    %v957 = vsel %vm160, %v809, 0
    %v960 = vsel %vm160, %v810, 0
    %v963 = vsel %vm160, %v811, 0
    %v966 = vsel %vm160, %v812, 0
    %v969 = vsel %vm160, %v813, 0
    %v972 = vsel %vm160, %v814, 0
    %v975 = vsel %vm160, %v815, 0
    %v978 = vsel %vm160, %v816, 0
    %980 = vmatprep.subr.mxu0 0.0
    %981 = vmatpush1.msra.mxu0 %v825
    %982 = vmatprep.subr.mxu0 0.0
    %983 = vmatpush1.msra.mxu0 0.0
    %984 = vmatprep.subr.mxu0 0.0
    %985 = vmatpush1.msra.mxu0 0.0
    %986 = vmatprep.subr.mxu0 0.0
    %987 = vmatpush1.msra.mxu0 0.0
    %988 = vmatprep.subr.mxu0 0.0
    %989 = vmatpush1.msra.mxu0 0.0
    %990 = vmatprep.subr.mxu0 0.0
    %991 = vmatpush1.msra.mxu0 0.0
    %992 = vmatprep.subr.mxu0 0.0
    %993 = vmatpush1.msra.mxu0 0.0
    %994 = vmatprep.subr.mxu0 0.0
    %995 = vmatpush1.msra.mxu0 0.0
    %996 = vmatprep.subr.mxu0 0.0
    %997 = vmatpush1.msra.mxu0 0.0
    %998 = vmatprep.subr.mxu0 0.0
    %999 = vmatpush1.msra.mxu0 0.0
    %1000 = vmatprep.subr.mxu0 0.0
    %1001 = vmatpush1.msra.mxu0 0.0
    %1002 = vmatprep.subr.mxu0 0.0
    %1003 = vmatpush1.msra.mxu0 0.0
    %1004 = vmatprep.subr.mxu0 0.0
    %1005 = vmatpush1.msra.mxu0 0.0
    %1006 = vmatprep.subr.mxu0 0.0
    %1007 = vmatpush1.msra.mxu0 0.0
    %1008 = vmatprep.subr.mxu0 0.0
    %1009 = vmatpush1.msra.mxu0 0.0
    %1010 = vmatprep.subr.mxu0 0.0
    %1011 = vmatpush1.msra.mxu0 0.0
    %1012 = vmatprep.subr.mxu0 0.0
    %1013 = vmatpush1.msra.mxu0 0.0
    %1014 = vmatprep.subr.mxu0 0.0
    %1015 = vmatpush1.msra.mxu0 0.0
    %1016 = vmatprep.subr.mxu0 0.0
    %1017 = vmatpush1.msra.mxu0 0.0
    %1018 = vmatprep.subr.mxu0 0.0
    %1019 = vmatpush1.msra.mxu0 0.0
    %1020 = vmatprep.subr.mxu0 0.0
    %1021 = vmatpush1.msra.mxu0 0.0
    %1022 = vmatprep.subr.mxu0 0.0
    %1023 = vmatpush1.msra.mxu0 0.0
    %1024 = vmatprep.subr.mxu0 0.0
    %1025 = vmatpush1.msra.mxu0 0.0
    %1026 = vmatprep.subr.mxu0 0.0
    %1027 = vmatpush1.msra.mxu0 0.0
    %1028 = vmatprep.subr.mxu0 0.0
    %1029 = vmatpush1.msra.mxu0 0.0
    %1030 = vmatprep.subr.mxu0 0.0
    %1031 = vmatpush1.msra.mxu0 0.0
    %1032 = vmatprep.subr.mxu0 0.0
    %1033 = vmatpush1.msra.mxu0 0.0
    %1034 = vmatprep.subr.mxu0 0.0
    %1035 = vmatpush1.msra.mxu0 0.0
    %1036 = vmatprep.subr.mxu0 0.0
    %1037 = vmatpush1.msra.mxu0 0.0
    %1038 = vmatprep.subr.mxu0 0.0
    %1039 = vmatpush1.msra.mxu0 0.0
    %1040 = vmatprep.subr.mxu0 0.0
    %1041 = vmatpush1.msra.mxu0 0.0
    %1042 = vmatprep.subr.mxu0 0.0
    %1043 = vmatpush1.msra.mxu0 0.0
    %1044 = vmatprep.mubr.f32.mxu0 0.0
    %1045 = vmatmul.mubr.f32.gmra.mrb[0].mxu0 %v957
    %v1046 = vpop.f32.mrb[0].mxu0
    %v1047 = vadd.f32 %v918, %v1046
    %v1048 = vpop.f32.mrb[0].mxu0
    %1049 = vmatprep.mubr.f32.mxu0 0.0
    %1050 = vmatmul.mubr.f32.gmra.mrb[0].mxu0 %v960
    %v1051 = vpop.f32.mrb[0].mxu0
    %v1052 = vadd.f32 %v923, %v1051
    %v1053 = vpop.f32.mrb[0].mxu0
    %1054 = vmatprep.mubr.f32.mxu0 0.0
    %1055 = vmatmul.mubr.f32.gmra.mrb[0].mxu0 %v963
    %v1056 = vpop.f32.mrb[0].mxu0
    %v1057 = vadd.f32 %v928, %v1056
    %v1058 = vpop.f32.mrb[0].mxu0
    %1059 = vmatprep.mubr.f32.mxu0 0.0
    %1060 = vmatmul.mubr.f32.gmra.mrb[0].mxu0 %v966
    %v1061 = vpop.f32.mrb[0].mxu0
    %v1062 = vadd.f32 %v933, %v1061
    %v1063 = vpop.f32.mrb[0].mxu0
    %1064 = vmatprep.mubr.f32.mxu0 0.0
    %1065 = vmatmul.mubr.f32.gmra.mrb[0].mxu0 %v969
    %v1066 = vpop.f32.mrb[0].mxu0
    %v1067 = vadd.f32 %v938, %v1066
    %v1068 = vpop.f32.mrb[0].mxu0
    %1069 = vmatprep.mubr.f32.mxu0 0.0
    %1070 = vmatmul.mubr.f32.gmra.mrb[0].mxu0 %v972
    %v1071 = vpop.f32.mrb[0].mxu0
    %v1072 = vadd.f32 %v943, %v1071
    %v1073 = vpop.f32.mrb[0].mxu0
    %1074 = vmatprep.mubr.f32.mxu0 0.0
    %1075 = vmatmul.mubr.f32.gmra.mrb[0].mxu0 %v975
    %v1076 = vpop.f32.mrb[0].mxu0
    %v1077 = vadd.f32 %v948, %v1076
    %v1078 = vpop.f32.mrb[0].mxu0
    %1079 = vmatprep.mubr.f32.mxu0 0.0
    %1080 = vmatmul.mubr.f32.gmra.mrb[0].mxu0 %v978
    %v1081 = vpop.f32.mrb[0].mxu0
    %v1082 = vadd.f32 %v953, %v1081
    %v1083 = vpop.f32.mrb[0].mxu0
    %1084 = vdwg.mxu0
    %vm1085 = vcmask 80896
    %1086 = vst.msk [vmem:[#allocation7] sm:$0xff] %vm1085, %v1047
    %1087 = vst.msk [vmem:[#allocation7 + $0x8] sm:$0xff] %vm1085, %v1052
    %1088 = vst.msk [vmem:[#allocation7 + $0x10] sm:$0xff] %vm1085, %v1057
    %1089 = vst.msk [vmem:[#allocation7 + $0x18] sm:$0xff] %vm1085, %v1062
    %1090 = vst.msk [vmem:[#allocation7 + $0x20] sm:$0xff] %vm1085, %v1067
    %1091 = vst.msk [vmem:[#allocation7 + $0x28] sm:$0xff] %vm1085, %v1072
    %1092 = vst.msk [vmem:[#allocation7 + $0x30] sm:$0xff] %vm1085, %v1077
    %1093 = vst.msk [vmem:[#allocation7 + $0x38] sm:$0xff] %vm1085, %v1082
    %v1094 = vld [vmem:[#allocation4] sm:$0xff]
    %v1095 = vmul.f32 %v1094, 0.9
    %v1096 = vld [vmem:[#allocation7] sm:$0xff]
    %v1097 = vadd.f32 %v1095, %v1096
    %v1099 = vcombine.high %v1097, %v1097
    %v1101 = vunpack.c.l.s4 1966171168
    %v1102 = vunpack.c.0.s8 %v1101
    %v1103 = vlaneseq
    %v1104 = vshrl.u32 %v1103, 7
    %v1105 = vsub.s32 %v1102, %v1104
    %v1106 = vrot.slane %v1097, %v1105
    %v1108 = vunpack.c.l.s4 1966171168
    %v1109 = vunpack.c.0.s8 %v1108
    %v1110 = vlaneseq
    %v1111 = vshrl.u32 %v1110, 7
    %v1112 = vsub.s32 %v1109, %v1111
    %v1113 = vrot.slane %v1099, %v1112
    %v1114 = vcombine.high %v1106, %v1106
    %v1115 = vcombine.high %v1113, %v1113
    %v1117 = vunpack.c.l.s4 1966171168
    %v1118 = vunpack.c.0.s8 %v1117
    %v1119 = vlaneseq
    %v1120 = vshrl.u32 %v1119, 7
    %v1121 = vsub.s32 %v1118, %v1120
    %v1122 = vrot.slane %v1106, %v1121
    %v1124 = vunpack.c.l.s4 1966171168
    %v1125 = vunpack.c.0.s8 %v1124
    %v1126 = vlaneseq
    %v1127 = vshrl.u32 %v1126, 7
    %v1128 = vsub.s32 %v1125, %v1127
    %v1129 = vrot.slane %v1113, %v1128
    %v1131 = vunpack.c.l.s4 1966171168
    %v1132 = vunpack.c.0.s8 %v1131
    %v1133 = vlaneseq
    %v1134 = vshrl.u32 %v1133, 7
    %v1135 = vsub.s32 %v1132, %v1134
    %v1136 = vrot.slane %v1114, %v1135
    %v1138 = vunpack.c.l.s4 1966171168
    %v1139 = vunpack.c.0.s8 %v1138
    %v1140 = vlaneseq
    %v1141 = vshrl.u32 %v1140, 7
    %v1142 = vsub.s32 %v1139, %v1141
    %v1143 = vrot.slane %v1115, %v1142
    %v1144 = vcombine.high %v1122, %v1122
    %v1145 = vcombine.high %v1129, %v1129
    %v1146 = vcombine.high %v1136, %v1136
    %v1147 = vcombine.high %v1143, %v1143
    %vm1156 = vcmask 73728
    %1157 = vst.msk [vmem:[#allocation14] sm:$0x1] %vm1156, %v1122
    %1158 = vst.msk [vmem:[#allocation14 + $0x8] sm:$0x1] %vm1156, %v1136
    %1159 = vst.msk [vmem:[#allocation14 + $0x10] sm:$0x1] %vm1156, %v1144
    %1160 = vst.msk [vmem:[#allocation14 + $0x18] sm:$0x1] %vm1156, %v1146
    %1161 = vst.msk [vmem:[#allocation14 + $0x20] sm:$0x1] %vm1156, %v1129
    %1162 = vst.msk [vmem:[#allocation14 + $0x28] sm:$0x1] %vm1156, %v1143
    %1163 = vst.msk [vmem:[#allocation14 + $0x30] sm:$0x1] %vm1156, %v1145
    %1164 = vst.msk [vmem:[#allocation14 + $0x38] sm:$0x1] %vm1156, %v1147
    %v1165 = vmul.f32 %v1097, 0.9
    %v1166 = vld [vmem:[#allocation7 + $0x8] sm:$0xff]
    %v1167 = vadd.f32 %v1165, %v1166
    %v1169 = vcombine.high %v1167, %v1167
    %v1171 = vunpack.c.l.s4 1966171168
    %v1172 = vunpack.c.0.s8 %v1171
    %v1173 = vlaneseq
    %v1174 = vshrl.u32 %v1173, 7
    %v1175 = vsub.s32 %v1172, %v1174
    %v1176 = vrot.slane %v1167, %v1175
    %v1178 = vunpack.c.l.s4 1966171168
    %v1179 = vunpack.c.0.s8 %v1178
    %v1180 = vlaneseq
    %v1181 = vshrl.u32 %v1180, 7
    %v1182 = vsub.s32 %v1179, %v1181
    %v1183 = vrot.slane %v1169, %v1182
    %v1184 = vcombine.high %v1176, %v1176
    %v1185 = vcombine.high %v1183, %v1183
    %v1187 = vunpack.c.l.s4 1966171168
    %v1188 = vunpack.c.0.s8 %v1187
    %v1189 = vlaneseq
    %v1190 = vshrl.u32 %v1189, 7
    %v1191 = vsub.s32 %v1188, %v1190
    %v1192 = vrot.slane %v1176, %v1191
    %v1194 = vunpack.c.l.s4 1966171168
    %v1195 = vunpack.c.0.s8 %v1194
    %v1196 = vlaneseq
    %v1197 = vshrl.u32 %v1196, 7
    %v1198 = vsub.s32 %v1195, %v1197
    %v1199 = vrot.slane %v1183, %v1198
    %v1201 = vunpack.c.l.s4 1966171168
    %v1202 = vunpack.c.0.s8 %v1201
    %v1203 = vlaneseq
    %v1204 = vshrl.u32 %v1203, 7
    %v1205 = vsub.s32 %v1202, %v1204
    %v1206 = vrot.slane %v1184, %v1205
    %v1208 = vunpack.c.l.s4 1966171168
    %v1209 = vunpack.c.0.s8 %v1208
    %v1210 = vlaneseq
    %v1211 = vshrl.u32 %v1210, 7
    %v1212 = vsub.s32 %v1209, %v1211
    %v1213 = vrot.slane %v1185, %v1212
    %v1214 = vcombine.high %v1192, %v1192
    %v1215 = vcombine.high %v1199, %v1199
    %v1216 = vcombine.high %v1206, %v1206
    %v1217 = vcombine.high %v1213, %v1213
    %1226 = vst.msk [vmem:[#allocation14 + $0x1] sm:$0x1] %vm1156, %v1192
    %1227 = vst.msk [vmem:[#allocation14 + $0x9] sm:$0x1] %vm1156, %v1206
    %1228 = vst.msk [vmem:[#allocation14 + $0x11] sm:$0x1] %vm1156, %v1214
    %1229 = vst.msk [vmem:[#allocation14 + $0x19] sm:$0x1] %vm1156, %v1216
    %1230 = vst.msk [vmem:[#allocation14 + $0x21] sm:$0x1] %vm1156, %v1199
    %1231 = vst.msk [vmem:[#allocation14 + $0x29] sm:$0x1] %vm1156, %v1213
    %1232 = vst.msk [vmem:[#allocation14 + $0x31] sm:$0x1] %vm1156, %v1215
    %1233 = vst.msk [vmem:[#allocation14 + $0x39] sm:$0x1] %vm1156, %v1217
    %v1234 = vmul.f32 %v1167, 0.9
    %v1235 = vld [vmem:[#allocation7 + $0x10] sm:$0xff]
    %v1236 = vadd.f32 %v1234, %v1235
    %v1238 = vcombine.high %v1236, %v1236
    %v1240 = vunpack.c.l.s4 1966171168
    %v1241 = vunpack.c.0.s8 %v1240
    %v1242 = vlaneseq
    %v1243 = vshrl.u32 %v1242, 7
    %v1244 = vsub.s32 %v1241, %v1243
    %v1245 = vrot.slane %v1236, %v1244
    %v1247 = vunpack.c.l.s4 1966171168
    %v1248 = vunpack.c.0.s8 %v1247
    %v1249 = vlaneseq
    %v1250 = vshrl.u32 %v1249, 7
    %v1251 = vsub.s32 %v1248, %v1250
    %v1252 = vrot.slane %v1238, %v1251
    %v1253 = vcombine.high %v1245, %v1245
    %v1254 = vcombine.high %v1252, %v1252
    %v1256 = vunpack.c.l.s4 1966171168
    %v1257 = vunpack.c.0.s8 %v1256
    %v1258 = vlaneseq
    %v1259 = vshrl.u32 %v1258, 7
    %v1260 = vsub.s32 %v1257, %v1259
    %v1261 = vrot.slane %v1245, %v1260
    %v1263 = vunpack.c.l.s4 1966171168
    %v1264 = vunpack.c.0.s8 %v1263
    %v1265 = vlaneseq
    %v1266 = vshrl.u32 %v1265, 7
    %v1267 = vsub.s32 %v1264, %v1266
    %v1268 = vrot.slane %v1252, %v1267
    %v1270 = vunpack.c.l.s4 1966171168
    %v1271 = vunpack.c.0.s8 %v1270
    %v1272 = vlaneseq
    %v1273 = vshrl.u32 %v1272, 7
    %v1274 = vsub.s32 %v1271, %v1273
    %v1275 = vrot.slane %v1253, %v1274
    %v1277 = vunpack.c.l.s4 1966171168
    %v1278 = vunpack.c.0.s8 %v1277
    %v1279 = vlaneseq
    %v1280 = vshrl.u32 %v1279, 7
    %v1281 = vsub.s32 %v1278, %v1280
    %v1282 = vrot.slane %v1254, %v1281
    %v1283 = vcombine.high %v1261, %v1261
    %v1284 = vcombine.high %v1268, %v1268
    %v1285 = vcombine.high %v1275, %v1275
    %v1286 = vcombine.high %v1282, %v1282
    %1295 = vst.msk [vmem:[#allocation14 + $0x2] sm:$0x1] %vm1156, %v1261
    %1296 = vst.msk [vmem:[#allocation14 + $0xa] sm:$0x1] %vm1156, %v1275
    %1297 = vst.msk [vmem:[#allocation14 + $0x12] sm:$0x1] %vm1156, %v1283
    %1298 = vst.msk [vmem:[#allocation14 + $0x1a] sm:$0x1] %vm1156, %v1285
    %1299 = vst.msk [vmem:[#allocation14 + $0x22] sm:$0x1] %vm1156, %v1268
    %1300 = vst.msk [vmem:[#allocation14 + $0x2a] sm:$0x1] %vm1156, %v1282
    %1301 = vst.msk [vmem:[#allocation14 + $0x32] sm:$0x1] %vm1156, %v1284
    %1302 = vst.msk [vmem:[#allocation14 + $0x3a] sm:$0x1] %vm1156, %v1286
    %v1303 = vmul.f32 %v1236, 0.9
    %v1304 = vld [vmem:[#allocation7 + $0x18] sm:$0xff]
    %v1305 = vadd.f32 %v1303, %v1304
    %v1307 = vcombine.high %v1305, %v1305
    %v1309 = vunpack.c.l.s4 1966171168
    %v1310 = vunpack.c.0.s8 %v1309
    %v1311 = vlaneseq
    %v1312 = vshrl.u32 %v1311, 7
    %v1313 = vsub.s32 %v1310, %v1312
    %v1314 = vrot.slane %v1305, %v1313
    %v1316 = vunpack.c.l.s4 1966171168
    %v1317 = vunpack.c.0.s8 %v1316
    %v1318 = vlaneseq
    %v1319 = vshrl.u32 %v1318, 7
    %v1320 = vsub.s32 %v1317, %v1319
    %v1321 = vrot.slane %v1307, %v1320
    %v1322 = vcombine.high %v1314, %v1314
    %v1323 = vcombine.high %v1321, %v1321
    %v1325 = vunpack.c.l.s4 1966171168
    %v1326 = vunpack.c.0.s8 %v1325
    %v1327 = vlaneseq
    %v1328 = vshrl.u32 %v1327, 7
    %v1329 = vsub.s32 %v1326, %v1328
    %v1330 = vrot.slane %v1314, %v1329
    %v1332 = vunpack.c.l.s4 1966171168
    %v1333 = vunpack.c.0.s8 %v1332
    %v1334 = vlaneseq
    %v1335 = vshrl.u32 %v1334, 7
    %v1336 = vsub.s32 %v1333, %v1335
    %v1337 = vrot.slane %v1321, %v1336
    %v1339 = vunpack.c.l.s4 1966171168
    %v1340 = vunpack.c.0.s8 %v1339
    %v1341 = vlaneseq
    %v1342 = vshrl.u32 %v1341, 7
    %v1343 = vsub.s32 %v1340, %v1342
    %v1344 = vrot.slane %v1322, %v1343
    %v1346 = vunpack.c.l.s4 1966171168
    %v1347 = vunpack.c.0.s8 %v1346
    %v1348 = vlaneseq
    %v1349 = vshrl.u32 %v1348, 7
    %v1350 = vsub.s32 %v1347, %v1349
    %v1351 = vrot.slane %v1323, %v1350
    %v1352 = vcombine.high %v1330, %v1330
    %v1353 = vcombine.high %v1337, %v1337
    %v1354 = vcombine.high %v1344, %v1344
    %v1355 = vcombine.high %v1351, %v1351
    %1364 = vst.msk [vmem:[#allocation14 + $0x3] sm:$0x1] %vm1156, %v1330
    %1365 = vst.msk [vmem:[#allocation14 + $0xb] sm:$0x1] %vm1156, %v1344
    %1366 = vst.msk [vmem:[#allocation14 + $0x13] sm:$0x1] %vm1156, %v1352
    %1367 = vst.msk [vmem:[#allocation14 + $0x1b] sm:$0x1] %vm1156, %v1354
    %1368 = vst.msk [vmem:[#allocation14 + $0x23] sm:$0x1] %vm1156, %v1337
    %1369 = vst.msk [vmem:[#allocation14 + $0x2b] sm:$0x1] %vm1156, %v1351
    %1370 = vst.msk [vmem:[#allocation14 + $0x33] sm:$0x1] %vm1156, %v1353
    %1371 = vst.msk [vmem:[#allocation14 + $0x3b] sm:$0x1] %vm1156, %v1355
    %v1372 = vmul.f32 %v1305, 0.9
    %v1373 = vld [vmem:[#allocation7 + $0x20] sm:$0xff]
    %v1374 = vadd.f32 %v1372, %v1373
    %v1376 = vcombine.high %v1374, %v1374
    %v1378 = vunpack.c.l.s4 1966171168
    %v1379 = vunpack.c.0.s8 %v1378
    %v1380 = vlaneseq
    %v1381 = vshrl.u32 %v1380, 7
    %v1382 = vsub.s32 %v1379, %v1381
    %v1383 = vrot.slane %v1374, %v1382
    %v1385 = vunpack.c.l.s4 1966171168
    %v1386 = vunpack.c.0.s8 %v1385
    %v1387 = vlaneseq
    %v1388 = vshrl.u32 %v1387, 7
    %v1389 = vsub.s32 %v1386, %v1388
    %v1390 = vrot.slane %v1376, %v1389
    %v1391 = vcombine.high %v1383, %v1383
    %v1392 = vcombine.high %v1390, %v1390
    %v1394 = vunpack.c.l.s4 1966171168
    %v1395 = vunpack.c.0.s8 %v1394
    %v1396 = vlaneseq
    %v1397 = vshrl.u32 %v1396, 7
    %v1398 = vsub.s32 %v1395, %v1397
    %v1399 = vrot.slane %v1383, %v1398
    %v1401 = vunpack.c.l.s4 1966171168
    %v1402 = vunpack.c.0.s8 %v1401
    %v1403 = vlaneseq
    %v1404 = vshrl.u32 %v1403, 7
    %v1405 = vsub.s32 %v1402, %v1404
    %v1406 = vrot.slane %v1390, %v1405
    %v1408 = vunpack.c.l.s4 1966171168
    %v1409 = vunpack.c.0.s8 %v1408
    %v1410 = vlaneseq
    %v1411 = vshrl.u32 %v1410, 7
    %v1412 = vsub.s32 %v1409, %v1411
    %v1413 = vrot.slane %v1391, %v1412
    %v1415 = vunpack.c.l.s4 1966171168
    %v1416 = vunpack.c.0.s8 %v1415
    %v1417 = vlaneseq
    %v1418 = vshrl.u32 %v1417, 7
    %v1419 = vsub.s32 %v1416, %v1418
    %v1420 = vrot.slane %v1392, %v1419
    %v1421 = vcombine.high %v1399, %v1399
    %v1422 = vcombine.high %v1406, %v1406
    %v1423 = vcombine.high %v1413, %v1413
    %v1424 = vcombine.high %v1420, %v1420
    %1433 = vst.msk [vmem:[#allocation14 + $0x4] sm:$0x1] %vm1156, %v1399
    %1434 = vst.msk [vmem:[#allocation14 + $0xc] sm:$0x1] %vm1156, %v1413
    %1435 = vst.msk [vmem:[#allocation14 + $0x14] sm:$0x1] %vm1156, %v1421
    %1436 = vst.msk [vmem:[#allocation14 + $0x1c] sm:$0x1] %vm1156, %v1423
    %1437 = vst.msk [vmem:[#allocation14 + $0x24] sm:$0x1] %vm1156, %v1406
    %1438 = vst.msk [vmem:[#allocation14 + $0x2c] sm:$0x1] %vm1156, %v1420
    %1439 = vst.msk [vmem:[#allocation14 + $0x34] sm:$0x1] %vm1156, %v1422
    %1440 = vst.msk [vmem:[#allocation14 + $0x3c] sm:$0x1] %vm1156, %v1424
    %v1441 = vmul.f32 %v1374, 0.9
    %v1442 = vld [vmem:[#allocation7 + $0x28] sm:$0xff]
    %v1443 = vadd.f32 %v1441, %v1442
    %v1445 = vcombine.high %v1443, %v1443
    %v1447 = vunpack.c.l.s4 1966171168
    %v1448 = vunpack.c.0.s8 %v1447
    %v1449 = vlaneseq
    %v1450 = vshrl.u32 %v1449, 7
    %v1451 = vsub.s32 %v1448, %v1450
    %v1452 = vrot.slane %v1443, %v1451
    %v1454 = vunpack.c.l.s4 1966171168
    %v1455 = vunpack.c.0.s8 %v1454
    %v1456 = vlaneseq
    %v1457 = vshrl.u32 %v1456, 7
    %v1458 = vsub.s32 %v1455, %v1457
    %v1459 = vrot.slane %v1445, %v1458
    %v1460 = vcombine.high %v1452, %v1452
    %v1461 = vcombine.high %v1459, %v1459
    %v1463 = vunpack.c.l.s4 1966171168
    %v1464 = vunpack.c.0.s8 %v1463
    %v1465 = vlaneseq
    %v1466 = vshrl.u32 %v1465, 7
    %v1467 = vsub.s32 %v1464, %v1466
    %v1468 = vrot.slane %v1452, %v1467
    %v1470 = vunpack.c.l.s4 1966171168
    %v1471 = vunpack.c.0.s8 %v1470
    %v1472 = vlaneseq
    %v1473 = vshrl.u32 %v1472, 7
    %v1474 = vsub.s32 %v1471, %v1473
    %v1475 = vrot.slane %v1459, %v1474
    %v1477 = vunpack.c.l.s4 1966171168
    %v1478 = vunpack.c.0.s8 %v1477
    %v1479 = vlaneseq
    %v1480 = vshrl.u32 %v1479, 7
    %v1481 = vsub.s32 %v1478, %v1480
    %v1482 = vrot.slane %v1460, %v1481
    %v1484 = vunpack.c.l.s4 1966171168
    %v1485 = vunpack.c.0.s8 %v1484
    %v1486 = vlaneseq
    %v1487 = vshrl.u32 %v1486, 7
    %v1488 = vsub.s32 %v1485, %v1487
    %v1489 = vrot.slane %v1461, %v1488
    %v1490 = vcombine.high %v1468, %v1468
    %v1491 = vcombine.high %v1475, %v1475
    %v1492 = vcombine.high %v1482, %v1482
    %v1493 = vcombine.high %v1489, %v1489
    %1502 = vst.msk [vmem:[#allocation14 + $0x5] sm:$0x1] %vm1156, %v1468
    %1503 = vst.msk [vmem:[#allocation14 + $0xd] sm:$0x1] %vm1156, %v1482
    %1504 = vst.msk [vmem:[#allocation14 + $0x15] sm:$0x1] %vm1156, %v1490
    %1505 = vst.msk [vmem:[#allocation14 + $0x1d] sm:$0x1] %vm1156, %v1492
    %1506 = vst.msk [vmem:[#allocation14 + $0x25] sm:$0x1] %vm1156, %v1475
    %1507 = vst.msk [vmem:[#allocation14 + $0x2d] sm:$0x1] %vm1156, %v1489
    %1508 = vst.msk [vmem:[#allocation14 + $0x35] sm:$0x1] %vm1156, %v1491
    %1509 = vst.msk [vmem:[#allocation14 + $0x3d] sm:$0x1] %vm1156, %v1493
    %v1510 = vmul.f32 %v1443, 0.9
    %v1511 = vld [vmem:[#allocation7 + $0x30] sm:$0xff]
    %v1512 = vadd.f32 %v1510, %v1511
    %v1514 = vcombine.high %v1512, %v1512
    %v1516 = vunpack.c.l.s4 1966171168
    %v1517 = vunpack.c.0.s8 %v1516
    %v1518 = vlaneseq
    %v1519 = vshrl.u32 %v1518, 7
    %v1520 = vsub.s32 %v1517, %v1519
    %v1521 = vrot.slane %v1512, %v1520
    %v1523 = vunpack.c.l.s4 1966171168
    %v1524 = vunpack.c.0.s8 %v1523
    %v1525 = vlaneseq
    %v1526 = vshrl.u32 %v1525, 7
    %v1527 = vsub.s32 %v1524, %v1526
    %v1528 = vrot.slane %v1514, %v1527
    %v1529 = vcombine.high %v1521, %v1521
    %v1530 = vcombine.high %v1528, %v1528
    %v1532 = vunpack.c.l.s4 1966171168
    %v1533 = vunpack.c.0.s8 %v1532
    %v1534 = vlaneseq
    %v1535 = vshrl.u32 %v1534, 7
    %v1536 = vsub.s32 %v1533, %v1535
    %v1537 = vrot.slane %v1521, %v1536
    %v1539 = vunpack.c.l.s4 1966171168
    %v1540 = vunpack.c.0.s8 %v1539
    %v1541 = vlaneseq
    %v1542 = vshrl.u32 %v1541, 7
    %v1543 = vsub.s32 %v1540, %v1542
    %v1544 = vrot.slane %v1528, %v1543
    %v1546 = vunpack.c.l.s4 1966171168
    %v1547 = vunpack.c.0.s8 %v1546
    %v1548 = vlaneseq
    %v1549 = vshrl.u32 %v1548, 7
    %v1550 = vsub.s32 %v1547, %v1549
    %v1551 = vrot.slane %v1529, %v1550
    %v1553 = vunpack.c.l.s4 1966171168
    %v1554 = vunpack.c.0.s8 %v1553
    %v1555 = vlaneseq
    %v1556 = vshrl.u32 %v1555, 7
    %v1557 = vsub.s32 %v1554, %v1556
    %v1558 = vrot.slane %v1530, %v1557
    %v1559 = vcombine.high %v1537, %v1537
    %v1560 = vcombine.high %v1544, %v1544
    %v1561 = vcombine.high %v1551, %v1551
    %v1562 = vcombine.high %v1558, %v1558
    %1571 = vst.msk [vmem:[#allocation14 + $0x6] sm:$0x1] %vm1156, %v1537
    %1572 = vst.msk [vmem:[#allocation14 + $0xe] sm:$0x1] %vm1156, %v1551
    %1573 = vst.msk [vmem:[#allocation14 + $0x16] sm:$0x1] %vm1156, %v1559
    %1574 = vst.msk [vmem:[#allocation14 + $0x1e] sm:$0x1] %vm1156, %v1561
    %1575 = vst.msk [vmem:[#allocation14 + $0x26] sm:$0x1] %vm1156, %v1544
    %1576 = vst.msk [vmem:[#allocation14 + $0x2e] sm:$0x1] %vm1156, %v1558
    %1577 = vst.msk [vmem:[#allocation14 + $0x36] sm:$0x1] %vm1156, %v1560
    %1578 = vst.msk [vmem:[#allocation14 + $0x3e] sm:$0x1] %vm1156, %v1562
    %v1579 = vmul.f32 %v1512, 0.9
    %v1580 = vld [vmem:[#allocation7 + $0x38] sm:$0xff]
    %v1581 = vadd.f32 %v1579, %v1580
    %v1583 = vcombine.high %v1581, %v1581
    %v1585 = vunpack.c.l.s4 1966171168
    %v1586 = vunpack.c.0.s8 %v1585
    %v1587 = vlaneseq
    %v1588 = vshrl.u32 %v1587, 7
    %v1589 = vsub.s32 %v1586, %v1588
    %v1590 = vrot.slane %v1581, %v1589
    %v1592 = vunpack.c.l.s4 1966171168
    %v1593 = vunpack.c.0.s8 %v1592
    %v1594 = vlaneseq
    %v1595 = vshrl.u32 %v1594, 7
    %v1596 = vsub.s32 %v1593, %v1595
    %v1597 = vrot.slane %v1583, %v1596
    %v1598 = vcombine.high %v1590, %v1590
    %v1599 = vcombine.high %v1597, %v1597
    %v1601 = vunpack.c.l.s4 1966171168
    %v1602 = vunpack.c.0.s8 %v1601
    %v1603 = vlaneseq
    %v1604 = vshrl.u32 %v1603, 7
    %v1605 = vsub.s32 %v1602, %v1604
    %v1606 = vrot.slane %v1590, %v1605
    %v1608 = vunpack.c.l.s4 1966171168
    %v1609 = vunpack.c.0.s8 %v1608
    %v1610 = vlaneseq
    %v1611 = vshrl.u32 %v1610, 7
    %v1612 = vsub.s32 %v1609, %v1611
    %v1613 = vrot.slane %v1597, %v1612
    %v1615 = vunpack.c.l.s4 1966171168
    %v1616 = vunpack.c.0.s8 %v1615
    %v1617 = vlaneseq
    %v1618 = vshrl.u32 %v1617, 7
    %v1619 = vsub.s32 %v1616, %v1618
    %v1620 = vrot.slane %v1598, %v1619
    %v1622 = vunpack.c.l.s4 1966171168
    %v1623 = vunpack.c.0.s8 %v1622
    %v1624 = vlaneseq
    %v1625 = vshrl.u32 %v1624, 7
    %v1626 = vsub.s32 %v1623, %v1625
    %v1627 = vrot.slane %v1599, %v1626
    %v1628 = vcombine.high %v1606, %v1606
    %v1629 = vcombine.high %v1613, %v1613
    %v1630 = vcombine.high %v1620, %v1620
    %v1631 = vcombine.high %v1627, %v1627
    %1640 = vst.msk [vmem:[#allocation14 + $0x7] sm:$0x1] %vm1156, %v1606
    %1641 = vst.msk [vmem:[#allocation14 + $0xf] sm:$0x1] %vm1156, %v1620
    %1642 = vst.msk [vmem:[#allocation14 + $0x17] sm:$0x1] %vm1156, %v1628
    %1643 = vst.msk [vmem:[#allocation14 + $0x1f] sm:$0x1] %vm1156, %v1630
    %1644 = vst.msk [vmem:[#allocation14 + $0x27] sm:$0x1] %vm1156, %v1613
    %1645 = vst.msk [vmem:[#allocation14 + $0x2f] sm:$0x1] %vm1156, %v1627
    %1646 = vst.msk [vmem:[#allocation14 + $0x37] sm:$0x1] %vm1156, %v1629
    %1647 = vst.msk [vmem:[#allocation14 + $0x3f] sm:$0x1] %vm1156, %v1631
    %1648 = vst.msk [vmem:[#allocation4] sm:$0xff] %vm1085, %v1581
    // Predicated region
    $region30: #{tpu_custom_call.1} parent=1 // pred_check
      _
    $region31: #{tpu_custom_call.1} parent=1 // pred_check_branch
      %1650 = sbr.rel (0) target = $region33
    $region32: #{tpu_custom_call.1} parent=1 // pred_region
      %s1652 = ssub.s32 1024, 1024
      %1653 = vsyncadd [#allocation10], %s1652
      %s1654 = sshll.u32 [#allocation14], 4
      %s1655 = int_to_ptr.vmem [resolvable:$true] %s1654
      %1660 = dma.vmem_to_hbm [thread:$0]  %s1655, 1024, %s3, [#allocation10], 128, 128, 8
    $region33: #{tpu_custom_call.1} parent=1 // pred_fallthru
      _
    // Predicated region
    $region34: #{tpu_custom_call.1} parent=1 // pred_check
      _
    $region35: #{tpu_custom_call.1} parent=1 // pred_check_branch
      %1662 = sbr.rel (0) target = $region37
    $region36: #{tpu_custom_call.1} parent=1 // pred_region
      %1663 = dma.done [#allocation10], 1024
    $region37: #{tpu_custom_call.1} parent=1 // pred_fallthru
      _
    %1664 = vsyncpa [#allocation9], 1
    %1665 = vsyncpa [#allocation12], 1
    %1666 = vsyncpa [#allocation10], 1

</llo_original>
